<compile_context>
chip_gen: v7x
topology: tpu7x:2x2x1
jax: 0.10.0
libtpu: 0.0.40
codegen_flags: <defaults>
</compile_context>

<pallas_src>
import functools

import jax
import jax.numpy as jnp
from jax.experimental import pallas as pl
from jax.experimental.pallas import tpu as pltpu

ALPHA = 10.0                         # cfg.alpha
BETA = 0.05                          # cfg.beta
RAYS_PER_STEP = 2048                 # default kernel tiling knob (multiple of 128)
COLOR_STREAM_DTYPE = jnp.bfloat16    # HBM streaming dtype for color (math is f32)


def _round_up(x, m):
    return ((x + m - 1) // m) * m


def _cdiv(a, b):
    return (a + b - 1) // b


def _choose_chunk(n_rays, rays_per_step):
    """Largest 128-multiple chunk <= rays_per_step; ensure >=2 grid steps when
    there is more than one 128-ray tile of work so v7x's two TensorCores both
    get fed via dimension_semantics=("parallel",)."""
    chunk = _round_up(min(rays_per_step, n_rays), 128)
    if _cdiv(n_rays, chunk) < 2 and n_rays > 128:
        chunk = _round_up(_cdiv(n_rays, 2), 128)
    return chunk


def _render_kernel(tri_ref, lastmask_ref, depth_ref, dist_ref, color_ref,
                   out_ref, *, alpha, beta, n_pts):
    depth = depth_ref[...]                          # (T, P) f32, samples on lanes
    dist = dist_ref[...]                            # (T, P) f32
    color = color_ref[...].astype(jnp.float32)      # (C, T, P), bf16 on HBM
    tri = tri_ref[...]                              # (P, P) resident constant
    lastmask = lastmask_ref[...]                    # (1, P) resident constant

    # ---- sdf_to_density, single transcendental ----
    #   e = exp(-|d| / beta);  density = alpha * (d > 0 ? 0.5*e : 1 - 0.5*e)
    e = jnp.exp(-jnp.abs(dist) * (1.0 / beta))
    density = alpha * jnp.where(dist > 0, 0.5 * e, 1.0 - 0.5 * e)     # (T, P)

    # ---- deltas: depth[p+1] - depth[p], last segment = 1e10 ----
    depth_next = pltpu.roll(depth, shift=n_pts - 1, axis=1)    # == jnp.roll(-1)
    deltas = (depth_next - depth) * (1.0 - lastmask) + 1e10 * lastmask

    tau = density * deltas                                            # (T, P)

    # ---- exclusive cumulative transmittance ----
    # torch: cumprod(exp(-tau), 1) shifted by one (first entry = 1)
    #      == exp(-exclusive_cumsum(tau)); exclusive cumsum via MXU matmul with
    # the resident strictly-lower-triangular 0/1 matrix (free while mem-bound).
    # TODO(synk): if P grows well past 128, replace with a log2(P) roll-scan.
    excl = jnp.dot(tau, tri, preferred_element_type=jnp.float32)      # (T, P)

    trans = jnp.exp(-tau)                        # per-segment transmittance
    weights = jnp.exp(-excl) * (1.0 - trans)     # (T, P)

    # ---- aggregate per channel: out[c, t] = sum_p weights[t, p] * color[c, t, p]
    out_ref[...] = jnp.sum(weights[None, :, :] * color, axis=-1)      # (C, T)


def volume_sdf_render(distance, color, depth_values,
                      alpha=ALPHA, beta=BETA, rays_per_step=RAYS_PER_STEP,
                      color_stream_dtype=COLOR_STREAM_DTYPE):
    """Pallas implementation of VolumeSDFRenderer.forward (light_dir=None)."""
    R, P = depth_values.shape
    C = color.shape[-1]

    depth = depth_values.astype(jnp.float32)                       # (R, P)
    dist = distance.reshape(R, P).astype(jnp.float32)              # (R, P)
    # Channel-major (C, R, P), narrow dtype: samples land on lanes for the
    # dominant tensor, and the one remaining layout-plumbing copy is in bf16.
    # TODO(synk): have the upstream implicit_fn emit (C, R, P) bf16 directly.
    col = jnp.transpose(color.reshape(R, P, C), (2, 0, 1)).astype(color_stream_dtype)

    chunk = _choose_chunk(R, rays_per_step)
    # Uneven tail block handled by Pallas (OOB reads undefined per-ray, OOB
    # stores masked) -> no jnp.pad copies of the inputs.
    grid = (_cdiv(R, chunk),)

    # Grid-invariant constants, built once and kept resident in VMEM across all
    # grid steps (constant index_maps -> single DMA, no per-step iota/compare).
    row = jax.lax.broadcasted_iota(jnp.int32, (P, P), 0)
    colm = jax.lax.broadcasted_iota(jnp.int32, (P, P), 1)
    tri = (row < colm).astype(jnp.float32)                            # (P, P)
    lastmask = (jnp.arange(P) == P - 1).astype(jnp.float32)[None, :]  # (1, P)

    # VMEM budget: double-buffered pipelined blocks + resident constants.
    c_item = jnp.dtype(color_stream_dtype).itemsize
    vmem_est = (2 * (C * chunk * P * c_item          # color block
                     + 2 * chunk * P * 4             # depth + dist blocks
                     + C * chunk * 4)                # output block
                + P * P * 4 + P * 4)                 # tri + lastmask
    compiler_kwargs = {}
    if vmem_est > (14 << 20):                        # past v5e's 16 MiB default
        compiler_kwargs["vmem_limit_bytes"] = min(int(vmem_est * 5 // 4), 64 << 20)

    kernel = functools.partial(_render_kernel, alpha=float(alpha),
                               beta=float(beta), n_pts=P)

    out_cr = pl.pallas_call(
        kernel,
        out_shape=jax.ShapeDtypeStruct((C, R), jnp.float32),
        grid=grid,
        in_specs=[
            pl.BlockSpec((P, P), lambda i: (0, 0)),             # tri (resident)
            pl.BlockSpec((1, P), lambda i: (0, 0)),             # lastmask (resident)
            pl.BlockSpec((chunk, P), lambda i: (i, 0)),         # depth (f32)
            pl.BlockSpec((chunk, P), lambda i: (i, 0)),         # distance (f32)
            pl.BlockSpec((C, chunk, P), lambda i: (0, i, 0)),   # color (bf16, channel-major)
        ],
        out_specs=pl.BlockSpec((C, chunk), lambda i: (0, i)),   # lane-dense store
        compiler_params=pltpu.CompilerParams(
            dimension_semantics=("parallel",), **compiler_kwargs),
    )(tri, lastmask, depth, dist, col)

    rendered = out_cr.T                                          # (R, C)

    # light_dir is None: geometry stays zeros_like(color), never relit or
    # aggregated (exactly the PyTorch path). Trivial XLA constant, not a kernel
    # HBM write.
    geometry = jnp.zeros((R * P, C), jnp.float32)
    return {"color": rendered, "geometry": geometry}


def _reference(distance, color, depth_values, alpha, beta):
    """Pure-JAX transcription of the PyTorch forward (light_dir=None)."""
    R, P = depth_values.shape
    dist = distance.reshape(R, P)
    col = color.reshape(R, P, -1)
    phi = 0.5 * jnp.exp(-dist / beta)
    phi2 = 1.0 - 0.5 * jnp.exp(dist / beta)
    density = alpha * jnp.where(dist > 0, phi, phi2)
    deltas = jnp.concatenate(
        [depth_values[:, 1:] - depth_values[:, :-1],
         1e10 * jnp.ones_like(depth_values[:, :1])], axis=-1)
    trans = jnp.exp(-density * deltas)
    cum = jnp.ones_like(trans)
    cum = cum.at[:, 1:].set(jnp.cumprod(trans, axis=1)[:, :-1])
    weights = cum * (1.0 - trans)
    return jnp.sum(weights[:, :, None] * col, axis=1)


if __name__ == "__main__":
    # R not a multiple of 128 so the unpadded tail-block path is exercised,
    # and two chunk settings so both the multi-step and the v7x chunk-cap
    # paths run.
    R, P, C = 300, 64, 3
    key = jax.random.PRNGKey(0)
    k_depth, k_dist, k_color = jax.random.split(key, 3)

    # monotonically increasing sample depths per ray
    depth_values = jnp.cumsum(
        0.1 + jax.random.uniform(k_depth, (R, P), jnp.float32), axis=1)
    # signed distances near the surface, shaped like implicit_fn output (N, 1)
    distance = 0.1 * jax.random.normal(k_dist, (R * P, 1), jnp.float32)
    # per-sample colors in [0, 1], shaped (N, 3)
    color = jax.random.uniform(k_color, (R * P, C), jnp.float32)

    out_small = volume_sdf_render(distance, color, depth_values, rays_per_step=128)
    out_big = volume_sdf_render(distance, color, depth_values)  # default chunk path
    jax.block_until_ready(out_small["color"])
    jax.block_until_ready(out_big["color"])
    jax.block_until_ready(out_small["geometry"])

    # Reference sees the same bf16-quantized color the kernel streams, so the
    # comparison isolates the (all-f32) rendering math.
    color_q = color.astype(COLOR_STREAM_DTYPE).astype(jnp.float32)
    ref = _reference(distance, color_q, depth_values, ALPHA, BETA)

    assert out_small["color"].shape == (R, C)
    assert out_small["geometry"].shape == (R * P, C)
    assert jnp.allclose(out_small["color"], ref, rtol=1e-4, atol=1e-5), (
        "mismatch vs reference (chunk=128 path)")
    assert jnp.allclose(out_big["color"], ref, rtol=1e-4, atol=1e-5), (
        "mismatch vs reference (default chunk path)")
    assert jnp.all(out_small["geometry"] == 0.0)

    print("KERNEL_OK")
</pallas_src>

<mosaic_0001>
module attributes {stable_mosaic.version = 11 : i64} {
  func.func @_render_kernel(%arg0: i32, %arg1: memref<64x64xf32, #tpu.memory_space<vmem>>, %arg2: memref<1x64xf32, #tpu.memory_space<vmem>>, %arg3: memref<128x64xf32, #tpu.memory_space<vmem>>, %arg4: memref<128x64xf32, #tpu.memory_space<vmem>>, %arg5: memref<3x128x64xbf16, #tpu.memory_space<vmem>>, %arg6: memref<3x128xf32, #tpu.memory_space<vmem>>) attributes {dimension_semantics = [#tpu.dimension_semantics<parallel>], iteration_bounds = array<i64: 3>, scalar_prefetch = 0 : i64, scratch_operands = 0 : i64, tpu.core_type = #tpu.core_type<tc>, window_params = [{pipeline_mode = #tpu.pipeline_mode<synchronous>, transform_indices = @transform_0, window_bounds = array<i64: 64, 64>}, {pipeline_mode = #tpu.pipeline_mode<synchronous>, transform_indices = @transform_1, window_bounds = array<i64: 1, 64>}, {transform_indices = @transform_2, window_bounds = array<i64: 128, 64>}, {transform_indices = @transform_3, window_bounds = array<i64: 128, 64>}, {transform_indices = @transform_4, window_bounds = array<i64: 3, 128, 64>}, {transform_indices = @transform_5, window_bounds = array<i64: 3, 128>}]} {
    %c0 = arith.constant 0 : index
    %c0_0 = arith.constant 0 : index
    %0 = vector.load %arg3[%c0, %c0_0] : memref<128x64xf32, #tpu.memory_space<vmem>>, vector<128x64xf32>
    %c0_1 = arith.constant 0 : index
    %c0_2 = arith.constant 0 : index
    %1 = vector.load %arg4[%c0_1, %c0_2] : memref<128x64xf32, #tpu.memory_space<vmem>>, vector<128x64xf32>
    %c0_3 = arith.constant 0 : index
    %c0_4 = arith.constant 0 : index
    %c0_5 = arith.constant 0 : index
    %2 = vector.load %arg5[%c0_3, %c0_4, %c0_5] : memref<3x128x64xbf16, #tpu.memory_space<vmem>>, vector<3x128x64xbf16>
    %3 = arith.extf %2 : vector<3x128x64xbf16> to vector<3x128x64xf32>
    %c0_6 = arith.constant 0 : index
    %c0_7 = arith.constant 0 : index
    %4 = vector.load %arg1[%c0_6, %c0_7] : memref<64x64xf32, #tpu.memory_space<vmem>>, vector<64x64xf32>
    %c0_8 = arith.constant 0 : index
    %c0_9 = arith.constant 0 : index
    %5 = vector.load %arg2[%c0_8, %c0_9] : memref<1x64xf32, #tpu.memory_space<vmem>>, vector<1x64xf32>
    %6 = math.absf %1 : vector<128x64xf32>
    %cst = arith.constant 0.000000e+00 : f32
    %7 = vector.broadcast %cst : f32 to vector<128x64xf32>
    %8 = arith.subf %7, %6 : vector<128x64xf32>
    %cst_10 = arith.constant 2.000000e+01 : f32
    %9 = vector.broadcast %cst_10 : f32 to vector<128x64xf32>
    %10 = arith.mulf %8, %9 : vector<128x64xf32>
    %11 = math.exp %10 : vector<128x64xf32>
    %cst_11 = arith.constant 0.000000e+00 : f32
    %12 = vector.broadcast %cst_11 : f32 to vector<128x64xf32>
    %13 = arith.cmpf ogt, %1, %12 : vector<128x64xf32>
    %cst_12 = arith.constant 5.000000e-01 : f32
    %14 = vector.broadcast %cst_12 : f32 to vector<128x64xf32>
    %15 = arith.mulf %14, %11 : vector<128x64xf32>
    %cst_13 = arith.constant 5.000000e-01 : f32
    %16 = vector.broadcast %cst_13 : f32 to vector<128x64xf32>
    %17 = arith.mulf %16, %11 : vector<128x64xf32>
    %cst_14 = arith.constant 1.000000e+00 : f32
    %18 = vector.broadcast %cst_14 : f32 to vector<128x64xf32>
    %19 = arith.subf %18, %17 : vector<128x64xf32>
    %20 = arith.select %13, %15, %19 : vector<128x64xi1>, vector<128x64xf32>
    %cst_15 = arith.constant 1.000000e+01 : f32
    %21 = vector.broadcast %cst_15 : f32 to vector<128x64xf32>
    %22 = arith.mulf %21, %20 : vector<128x64xf32>
    %c63_i32 = arith.constant 63 : i32
    %23 = tpu.dynamic_rotate %0 by %c63_i32 dim 1 : vector<128x64xf32>, i32 -> vector<128x64xf32>
    %24 = arith.subf %23, %0 : vector<128x64xf32>
    %cst_16 = arith.constant 1.000000e+00 : f32
    %25 = vector.broadcast %cst_16 : f32 to vector<1x64xf32>
    %26 = arith.subf %25, %5 : vector<1x64xf32>
    %27 = vector.broadcast %26 : vector<1x64xf32> to vector<128x64xf32>
    %28 = arith.mulf %24, %27 : vector<128x64xf32>
    %cst_17 = arith.constant 1.000000e+10 : f32
    %29 = vector.broadcast %cst_17 : f32 to vector<1x64xf32>
    %30 = arith.mulf %29, %5 : vector<1x64xf32>
    %31 = vector.broadcast %30 : vector<1x64xf32> to vector<128x64xf32>
    %32 = arith.addf %28, %31 : vector<128x64xf32>
    %33 = arith.mulf %22, %32 : vector<128x64xf32>
    %cst_18 = arith.constant dense<0.000000e+00> : vector<128x64xf32>
    %34 = tpu.matmul %33, %4, %cst_18 {dimension_numbers = #tpu.dot_dimension_numbers<[1], [0], [0], [1], [0, 0, 1, 1], [], []>} : vector<128x64xf32>, vector<64x64xf32>, vector<128x64xf32> -> vector<128x64xf32>
    %cst_19 = arith.constant 0.000000e+00 : f32
    %35 = vector.broadcast %cst_19 : f32 to vector<128x64xf32>
    %36 = arith.subf %35, %33 : vector<128x64xf32>
    %37 = math.exp %36 : vector<128x64xf32>
    %cst_20 = arith.constant 0.000000e+00 : f32
    %38 = vector.broadcast %cst_20 : f32 to vector<128x64xf32>
    %39 = arith.subf %38, %34 : vector<128x64xf32>
    %40 = math.exp %39 : vector<128x64xf32>
    %cst_21 = arith.constant 1.000000e+00 : f32
    %41 = vector.broadcast %cst_21 : f32 to vector<128x64xf32>
    %42 = arith.subf %41, %37 : vector<128x64xf32>
    %43 = arith.mulf %40, %42 : vector<128x64xf32>
    %44 = vector.shape_cast %43 : vector<128x64xf32> to vector<1x128x64xf32>
    %45 = vector.broadcast %44 : vector<1x128x64xf32> to vector<3x128x64xf32>
    %46 = arith.mulf %45, %3 : vector<3x128x64xf32>
    %cst_22 = arith.constant dense<0.000000e+00> : vector<3x128xf32>
    %47 = vector.multi_reduction <add>, %46, %cst_22 [2] : vector<3x128x64xf32> to vector<3x128xf32>
    %c0_23 = arith.constant 0 : index
    %c0_24 = arith.constant 0 : index
    %48 = vector.load %arg6[%c0_23, %c0_24] : memref<3x128xf32, #tpu.memory_space<vmem>>, vector<3x128xf32>
    tpu.vector_store %arg6[%c0_23, %c0_24], %47 {strides = array<i32>} : memref<3x128xf32, #tpu.memory_space<vmem>>, vector<3x128xf32>,
    return
  }
  func.func @transform_0(%arg0: i32) -> (i32, i32) {
    %c0_i32 = arith.constant 0 : i32
    %c0_i32_0 = arith.constant 0 : i32
    %c0_i32_1 = arith.constant 0 : i32
    return %c0_i32, %c0_i32_0 : i32, i32
  }
  func.func @transform_1(%arg0: i32) -> (i32, i32) {
    %c0_i32 = arith.constant 0 : i32
    %c0_i32_0 = arith.constant 0 : i32
    %c0_i32_1 = arith.constant 0 : i32
    return %c0_i32, %c0_i32_0 : i32, i32
  }
  func.func @transform_2(%arg0: i32) -> (i32, i32) {
    %c0_i32 = arith.constant 0 : i32
    %c0_i32_0 = arith.constant 0 : i32
    return %arg0, %c0_i32 : i32, i32
  }
  func.func @transform_3(%arg0: i32) -> (i32, i32) {
    %c0_i32 = arith.constant 0 : i32
    %c0_i32_0 = arith.constant 0 : i32
    return %arg0, %c0_i32 : i32, i32
  }
  func.func @transform_4(%arg0: i32) -> (i32, i32, i32) {
    %c0_i32 = arith.constant 0 : i32
    %c0_i32_0 = arith.constant 0 : i32
    %c0_i32_1 = arith.constant 0 : i32
    return %c0_i32, %arg0, %c0_i32_0 : i32, i32, i32
  }
  func.func @transform_5(%arg0: i32) -> (i32, i32) {
    %c0_i32 = arith.constant 0 : i32
    %c0_i32_0 = arith.constant 0 : i32
    return %c0_i32, %arg0 : i32, i32
  }
}

</mosaic_0001>

<llo_original>
// kernel: tpu_custom_call.1
$region0: #{tpu_custom_call.1}
  #allocation0 [shape = 'u32[]', space=smem, size = 0x4, offset = 0x4, fixed_abs, tag = 'smem constant byte address 0x4 - core index']
  #allocation1 [shape = 'u32[144,128]{1,0:T(1,128)}', space=vmem, size = 0x12000, scoped, tag = 'internal scratch']
  %s0 = inlined_call_operand.vmem [shape: f32[64,64], index: 0, kind: input, shape index: {}]
  %s1 = inlined_call_operand.vmem [shape: f32[1,64], index: 1, kind: input, shape index: {}]
  %s2 = inlined_call_operand.vmem [shape: f32[300,64], index: 2, kind: input, shape index: {}]
  %s3 = inlined_call_operand.vmem [shape: f32[300,64], index: 3, kind: input, shape index: {}]
  %s4 = inlined_call_operand.vmem [shape: bf16[3,300,64], index: 4, kind: input, shape index: {}]
  %s5 = inlined_call_operand.hbm [shape: f32[3,300], index: 5, kind: output, shape index: {}]
  %s6 = sld [smem:[#allocation0]]
  $region115: #{tpu_custom_call.1} parent=0
    _
  %s8 = ssub.s32 1, %s6
  %s9 = scalar_select 0, %s8, %s6
  $region1: #{tpu_custom_call.1} parent=0
    #allocation2 [shape = 'u8[196608]{0}', space=vmem, size = 0x30000, scoped, tag = 'input window, operand 4']
    #allocation3 [shape = 'u8[4096]{0}', space=vmem, size = 0x1000, scoped, tag = 'output window, operand 0']
    #allocation4 [shape = 's32[2]{0}', space=sflag, size = 0x8, scoped, tag = 'scoped memory for tpu_custom_call.1']
    %10 = vsyncpa [#allocation4], 0
    %s11 = scalar_lea.sflag [#allocation4], 1
    %12 = vsyncpa %s11, 0
    loop: start=0, step=1, limit=5
    $region2: #{tpu_custom_call.1} parent=1 // loop_pre_header
      _
    $region3: #{tpu_custom_call.1} parent=1 // loop_header
      %s14 = sphi 0, %s18
      %p15 = scmp.ge.s32.totalorder %s14, 5
      %s22 = sphi 0, %s22
      %s24 = sphi 0, %s22
      %s25 = sphi 0, %s24
      %s39 = sphi 0, %s25
      %s43 = sphi 0, %s43
      %s45 = sphi 0, %s43
      %s46 = sphi 0, %s45
      %s60 = sphi 0, %s46
      %s66 = sphi 0, %s68
      %s69 = sphi 0, %s66
      %s70 = sphi 0, %s69
      %s86 = sphi 0, %s70
      %s92 = sphi 0, %s94
      %s95 = sphi 0, %s92
      %s96 = sphi 0, %s95
      %s112 = sphi 0, %s96
      %s118 = sphi 0, %s120
      %s121 = sphi 0, %s118
      %s122 = sphi 0, %s121
      %s138 = sphi 0, %s122
      %s144 = sphi 0, %s146
      %s147 = sphi 0, %s144
      %s148 = sphi 0, %s147
      %s164 = sphi 0, %s148
    $region4: #{tpu_custom_call.1} parent=1 // loop_header_branch
      %17 = sbr.rel (%p15) target = $region8
    $region5: #{tpu_custom_call.1} parent=1 // loop_body
      %s19 = ssub.s32 %s14, 1
      %s20 = ssub.s32 %s14, 2
      %s21 = sadd.s32 %s14, 1
      %s23 = sadd.s32 %s22, 1
      %p26 = scmp.eq.s32.totalorder %s14, 2
      %p27 = scmp.ne.s32.totalorder %s22, %s24
      %p28 = scmp.eq.s32.totalorder %s14, 0
      %p29 = por %p27, %p28
      %p30 = scmp.ne.s32.totalorder %s22, %s24
      %p31 = scmp.eq.s32.totalorder %s19, 2
      %p32 = por %p30, %p31
      %p33 = scmp.ne.s32.totalorder %s24, %s25
      %p34 = scmp.eq.s32.totalorder %s19, 0
      %p35 = por %p33, %p34
      %p36 = scmp.ne.s32.totalorder %s24, %s25
      %p37 = scmp.eq.s32.totalorder %s20, 2
      %p38 = por %p36, %p37
      %p40 = scmp.ne.s32.totalorder %s25, %s39
      %p41 = scmp.eq.s32.totalorder %s20, 0
      %p42 = por %p40, %p41
      %s44 = sadd.s32 %s43, 1
      %p47 = scmp.eq.s32.totalorder %s14, 2
      %p48 = scmp.ne.s32.totalorder %s43, %s45
      %p49 = scmp.eq.s32.totalorder %s14, 0
      %p50 = por %p48, %p49
      %p51 = scmp.ne.s32.totalorder %s43, %s45
      %p52 = scmp.eq.s32.totalorder %s19, 2
      %p53 = por %p51, %p52
      %p54 = scmp.ne.s32.totalorder %s45, %s46
      %p55 = scmp.eq.s32.totalorder %s19, 0
      %p56 = por %p54, %p55
      %p57 = scmp.ne.s32.totalorder %s45, %s46
      %p58 = scmp.eq.s32.totalorder %s20, 2
      %p59 = por %p57, %p58
      %p61 = scmp.ne.s32.totalorder %s46, %s60
      %p62 = scmp.eq.s32.totalorder %s20, 0
      %p63 = por %p61, %p62
      %s64 = ssub.s32 %s14, %s21
      %p65 = scmp.eq.s32.totalorder %s64, 0
      %s67 = sadd.s32 %s66, 1
      %s68 = scalar_select %p65, %s66, %s67
      %p71 = pneg %p65
      %p72 = scmp.eq.s32.totalorder %s14, 2
      %p73 = por %p71, %p72
      %p74 = scmp.ne.s32.totalorder %s66, %s69
      %p75 = scmp.eq.s32.totalorder %s14, 0
      %p76 = por %p74, %p75
      %p77 = scmp.ne.s32.totalorder %s66, %s69
      %p78 = scmp.eq.s32.totalorder %s19, 2
      %p79 = por %p77, %p78
      %p80 = scmp.ne.s32.totalorder %s69, %s70
      %p81 = scmp.eq.s32.totalorder %s19, 0
      %p82 = por %p80, %p81
      %p83 = scmp.ne.s32.totalorder %s69, %s70
      %p84 = scmp.eq.s32.totalorder %s20, 2
      %p85 = por %p83, %p84
      %p87 = scmp.ne.s32.totalorder %s70, %s86
      %p88 = scmp.eq.s32.totalorder %s20, 0
      %p89 = por %p87, %p88
      %s90 = ssub.s32 %s14, %s21
      %p91 = scmp.eq.s32.totalorder %s90, 0
      %s93 = sadd.s32 %s92, 1
      %s94 = scalar_select %p91, %s92, %s93
      %p97 = pneg %p91
      %p98 = scmp.eq.s32.totalorder %s14, 2
      %p99 = por %p97, %p98
      %p100 = scmp.ne.s32.totalorder %s92, %s95
      %p101 = scmp.eq.s32.totalorder %s14, 0
      %p102 = por %p100, %p101
      %p103 = scmp.ne.s32.totalorder %s92, %s95
      %p104 = scmp.eq.s32.totalorder %s19, 2
      %p105 = por %p103, %p104
      %p106 = scmp.ne.s32.totalorder %s95, %s96
      %p107 = scmp.eq.s32.totalorder %s19, 0
      %p108 = por %p106, %p107
      %p109 = scmp.ne.s32.totalorder %s95, %s96
      %p110 = scmp.eq.s32.totalorder %s20, 2
      %p111 = por %p109, %p110
      %p113 = scmp.ne.s32.totalorder %s96, %s112
      %p114 = scmp.eq.s32.totalorder %s20, 0
      %p115 = por %p113, %p114
      %s116 = ssub.s32 %s14, %s21
      %p117 = scmp.eq.s32.totalorder %s116, 0
      %s119 = sadd.s32 %s118, 1
      %s120 = scalar_select %p117, %s118, %s119
      %p123 = pneg %p117
      %p124 = scmp.eq.s32.totalorder %s14, 2
      %p125 = por %p123, %p124
      %p126 = scmp.ne.s32.totalorder %s118, %s121
      %p127 = scmp.eq.s32.totalorder %s14, 0
      %p128 = por %p126, %p127
      %p129 = scmp.ne.s32.totalorder %s118, %s121
      %p130 = scmp.eq.s32.totalorder %s19, 2
      %p131 = por %p129, %p130
      %p132 = scmp.ne.s32.totalorder %s121, %s122
      %p133 = scmp.eq.s32.totalorder %s19, 0
      %p134 = por %p132, %p133
      %p135 = scmp.ne.s32.totalorder %s121, %s122
      %p136 = scmp.eq.s32.totalorder %s20, 2
      %p137 = por %p135, %p136
      %p139 = scmp.ne.s32.totalorder %s122, %s138
      %p140 = scmp.eq.s32.totalorder %s20, 0
      %p141 = por %p139, %p140
      %s142 = ssub.s32 %s14, %s21
      %p143 = scmp.eq.s32.totalorder %s142, 0
      %s145 = sadd.s32 %s144, 1
      %s146 = scalar_select %p143, %s144, %s145
      %p149 = pneg %p143
      %p150 = scmp.eq.s32.totalorder %s14, 2
      %p151 = por %p149, %p150
      %p152 = scmp.ne.s32.totalorder %s144, %s147
      %p153 = scmp.eq.s32.totalorder %s14, 0
      %p154 = por %p152, %p153
      %p155 = scmp.ne.s32.totalorder %s144, %s147
      %p156 = scmp.eq.s32.totalorder %s19, 2
      %p157 = por %p155, %p156
      %p158 = scmp.ne.s32.totalorder %s147, %s148
      %p159 = scmp.eq.s32.totalorder %s19, 0
      %p160 = por %p158, %p159
      %p161 = scmp.ne.s32.totalorder %s147, %s148
      %p162 = scmp.eq.s32.totalorder %s20, 2
      %p163 = por %p161, %p162
      %p165 = scmp.ne.s32.totalorder %s148, %s164
      %p166 = scmp.eq.s32.totalorder %s20, 0
      %p167 = por %p165, %p166
      %p168 = scmp.le.s32.totalorder 1, %s14
      %p169 = scmp.lt.s32.totalorder %s14, 4
      %p170 = pnand %p168, %p169
      %p171 = pneg %p170
      // Predicated region
      $region9: #{tpu_custom_call.1} parent=5 // pred_check
        _
      $region10: #{tpu_custom_call.1} parent=5 // pred_check_branch
        %173 = sbr.rel (%p170) target = $region12
      $region11: #{tpu_custom_call.1} parent=5 // pred_region
        %s174 = ssub.s32 %s14, 1
        // Predicated region
        $region13: #{tpu_custom_call.1} parent=11 // pred_check
          %p175 = pneg %p35
        $region14: #{tpu_custom_call.1} parent=11 // pred_check_branch
          %177 = sbr.rel (%p175) target = $region16
        $region15: #{tpu_custom_call.1} parent=11 // pred_region
          _
        $region16: #{tpu_custom_call.1} parent=11 // pred_fallthru
          _
        // Predicated region
        $region17: #{tpu_custom_call.1} parent=11 // pred_check
          %p178 = pneg %p56
        $region18: #{tpu_custom_call.1} parent=11 // pred_check_branch
          %180 = sbr.rel (%p178) target = $region20
        $region19: #{tpu_custom_call.1} parent=11 // pred_region
          _
        $region20: #{tpu_custom_call.1} parent=11 // pred_fallthru
          _
      $region12: #{tpu_custom_call.1} parent=5 // pred_fallthru
        _
      %p181 = scmp.lt.s32.totalorder %s14, 3
      // Predicated region
      $region21: #{tpu_custom_call.1} parent=5 // pred_check
        %p182 = pneg %p181
      $region22: #{tpu_custom_call.1} parent=5 // pred_check_branch
        %184 = sbr.rel (%p182) target = $region24
      $region23: #{tpu_custom_call.1} parent=5 // pred_region
        // Predicated region
        $region25: #{tpu_custom_call.1} parent=23 // pred_check
          %p185 = pneg %p76
        $region26: #{tpu_custom_call.1} parent=23 // pred_check_branch
          %187 = sbr.rel (%p185) target = $region28
        $region27: #{tpu_custom_call.1} parent=23 // pred_region
          %s188 = smul.u32 16, %s14
          %s189 = ssub.s32 38, %s188
          %p190 = scmp.lt.s32.totalorder %s189, 16
          %s191 = scalar_select %p190, %s189, 16
          %s192 = smul.u32 128, %s191
          %p193 = scmp.lt.s32.totalorder %s188, 37
          %s194 = scalar_select %p193, %s188, 37
          %s195 = smul.addr %s194, 8
          %s196 = scalar_lea.vmem %s2, %s195
          %s197 = smul.u32 16, %s14
          %s198 = ssub.s32 38, %s197
          %p199 = scmp.lt.s32.totalorder %s198, 16
          %s200 = scalar_select %p199, %s198, 16
          %s201 = smul.u32 128, %s200
        $region28: #{tpu_custom_call.1} parent=23 // pred_fallthru
          _
        // Predicated region
        $region29: #{tpu_custom_call.1} parent=23 // pred_check
          %p202 = pneg %p102
        $region30: #{tpu_custom_call.1} parent=23 // pred_check_branch
          %204 = sbr.rel (%p202) target = $region32
        $region31: #{tpu_custom_call.1} parent=23 // pred_region
          %s205 = smul.u32 16, %s14
          %s206 = ssub.s32 38, %s205
          %p207 = scmp.lt.s32.totalorder %s206, 16
          %s208 = scalar_select %p207, %s206, 16
          %s209 = smul.u32 128, %s208
          %p210 = scmp.lt.s32.totalorder %s205, 37
          %s211 = scalar_select %p210, %s205, 37
          %s212 = smul.addr %s211, 8
          %s213 = scalar_lea.vmem %s3, %s212
          %s214 = smul.u32 16, %s14
          %s215 = ssub.s32 38, %s214
          %p216 = scmp.lt.s32.totalorder %s215, 16
          %s217 = scalar_select %p216, %s215, 16
          %s218 = smul.u32 128, %s217
        $region32: #{tpu_custom_call.1} parent=23 // pred_fallthru
          _
        // Predicated region
        $region33: #{tpu_custom_call.1} parent=23 // pred_check
          %p219 = pneg %p128
        $region34: #{tpu_custom_call.1} parent=23 // pred_check_branch
          %221 = sbr.rel (%p219) target = $region36
        $region35: #{tpu_custom_call.1} parent=23 // pred_region
          %s222 = sand.u32 %s118, 1
          %s223 = sand.u32 %s118, 1
          %s224 = smul.addr %s223, 192
          %s225 = scalar_lea.vmem [#allocation2], %s224
          %s226 = smul.u32 16, %s14
          %s227 = ssub.s32 38, %s226
          %p228 = scmp.lt.s32.totalorder %s227, 16
          %s229 = scalar_select %p228, %s227, 16
          %s230 = smul.u32 192, %s229
          %p231 = scmp.ne.s32.totalorder 0, %s230
          %s232 = smul.addr %s226, 4
          %s233 = scalar_lea.vmem %s4, %s232
          // Predicated region
          $region37: #{tpu_custom_call.1} parent=35 // pred_check
            %p234 = pneg %p231
          $region38: #{tpu_custom_call.1} parent=35 // pred_check_branch
            %236 = sbr.rel (%p234) target = $region40
          $region39: #{tpu_custom_call.1} parent=35 // pred_region
            // Predicated region
            $region41: #{tpu_custom_call.1} parent=39 // pred_check
              _
            $region42: #{tpu_custom_call.1} parent=39 // pred_check_branch
              %238 = sbr.rel target = $region44
            $region43: #{tpu_custom_call.1} parent=39 // pred_region
              // Predicated region
              $region63: #{tpu_custom_call.1} parent=43 // pred_check
                _
              $region64: #{tpu_custom_call.1} parent=43 // pred_check_branch
                %385 = sbr.rel (0) target = $region66
              $region65: #{tpu_custom_call.1} parent=43 // pred_region
                %s386 = sshrl.u32 %s229, 4
                // While loop
                $region67: #{tpu_custom_call.1} parent=65 // loop_pre_header
                  _
                $region68: #{tpu_custom_call.1} parent=65 // loop_header
                  %s388 = sphi 0, %s390
                  %p389 = scmp.ge.s32.totalorder %s388, %s386
                  %s393 = sphi 0, %s398
                  %s394 = sphi %s233, %s401
                  %s395 = sphi %s225, %s402
                $region69: #{tpu_custom_call.1} parent=65 // loop_header_branch
                  %392 = sbr.rel (%p389) target = $region73
                $region70: #{tpu_custom_call.1} parent=65 // loop_body
                  %s396 = sadd.s32 1, %s393
                  %p397 = scmp.ge.s32.totalorder %s396, %s386
                  %s398 = scalar_select %p397, 0, %s396
                  %s399 = smul.u32 %s398, 64
                  %s400 = smul.u32 %s398, 64
                  %s401 = scalar_lea.vmem %s233, %s399
                  %s402 = scalar_lea.vmem %s225, %s400 [#allocation2]
                $region71: #{tpu_custom_call.1} parent=65 // loop_footer
                  %s390 = sadd.s32 %s388, 1
                $region72: #{tpu_custom_call.1} parent=65 // loop_footer_branch
                  %387 = sbr.rel target = $region68
                $region73: #{tpu_custom_call.1} parent=65 // loop_exit
                  _
                %s403 = sshrl.u32 %s229, 4
                %s404 = sand.u32 %s229, 15
                %s405 = smul.u32 %s403, 16
                %s406 = smul.u32 4, %s405
                %s407 = scalar_lea.vmem %s233, %s406
                %s408 = smul.u32 4, %s405
                %s409 = scalar_lea.vmem %s225, %s408 [#allocation2]
                // While loop
                $region74: #{tpu_custom_call.1} parent=65 // loop_pre_header
                  _
                $region75: #{tpu_custom_call.1} parent=65 // loop_header
                  %s411 = sphi 0, %s413
                  %p412 = scmp.ge.s32.totalorder %s411, %s404
                  %s416 = sphi 0, %s421
                  %s417 = sphi %s407, %s424
                  %s418 = sphi %s409, %s425
                $region76: #{tpu_custom_call.1} parent=65 // loop_header_branch
                  %415 = sbr.rel (%p412) target = $region80
                $region77: #{tpu_custom_call.1} parent=65 // loop_body
                  %s419 = sadd.s32 1, %s416
                  %p420 = scmp.ge.s32.totalorder %s419, %s404
                  %s421 = scalar_select %p420, 0, %s419
                  %s422 = smul.u32 %s421, 4
                  %s423 = smul.u32 %s421, 4
                  %s424 = scalar_lea.vmem %s407, %s422
                  %s425 = scalar_lea.vmem %s409, %s423 [#allocation2]
                $region78: #{tpu_custom_call.1} parent=65 // loop_footer
                  %s413 = sadd.s32 %s411, 1
                $region79: #{tpu_custom_call.1} parent=65 // loop_footer_branch
                  %410 = sbr.rel target = $region75
                $region80: #{tpu_custom_call.1} parent=65 // loop_exit
                  _
                %s427 = sshrl.u32 %s229, 4
                // While loop
                $region81: #{tpu_custom_call.1} parent=65 // loop_pre_header
                  _
                $region82: #{tpu_custom_call.1} parent=65 // loop_header
                  %s429 = sphi 0, %s431
                  %p430 = scmp.ge.s32.totalorder %s429, %s427
                  %s434 = sphi 0, %s535
                  %s435 = sphi %s233, %s538
                  %s436 = sphi %s225, %s539
                $region83: #{tpu_custom_call.1} parent=65 // loop_header_branch
                  %433 = sbr.rel (%p430) target = $region87
                $region84: #{tpu_custom_call.1} parent=65 // loop_body
                  %v437 = vld [vmem:[%s435] sm:$0xf]
                  %438 = vst [vmem:[%s436] sm:$0xf] %v437
                  %v439 = vld [vmem:[%s435 + $0x4] sm:$0xf]
                  %440 = vst [vmem:[%s436 + $0x4] sm:$0xf] %v439
                  %v441 = vld [vmem:[%s435 + $0x8] sm:$0xf]
                  %442 = vst [vmem:[%s436 + $0x8] sm:$0xf] %v441
                  %v443 = vld [vmem:[%s435 + $0xc] sm:$0xf]
                  %444 = vst [vmem:[%s436 + $0xc] sm:$0xf] %v443
                  %v445 = vld [vmem:[%s435 + $0x10] sm:$0xf]
                  %446 = vst [vmem:[%s436 + $0x10] sm:$0xf] %v445
                  %v447 = vld [vmem:[%s435 + $0x14] sm:$0xf]
                  %448 = vst [vmem:[%s436 + $0x14] sm:$0xf] %v447
                  %v449 = vld [vmem:[%s435 + $0x18] sm:$0xf]
                  %450 = vst [vmem:[%s436 + $0x18] sm:$0xf] %v449
                  %v451 = vld [vmem:[%s435 + $0x1c] sm:$0xf]
                  %452 = vst [vmem:[%s436 + $0x1c] sm:$0xf] %v451
                  %v453 = vld [vmem:[%s435 + $0x20] sm:$0xf]
                  %454 = vst [vmem:[%s436 + $0x20] sm:$0xf] %v453
                  %v455 = vld [vmem:[%s435 + $0x24] sm:$0xf]
                  %456 = vst [vmem:[%s436 + $0x24] sm:$0xf] %v455
                  %v457 = vld [vmem:[%s435 + $0x28] sm:$0xf]
                  %458 = vst [vmem:[%s436 + $0x28] sm:$0xf] %v457
                  %v459 = vld [vmem:[%s435 + $0x2c] sm:$0xf]
                  %460 = vst [vmem:[%s436 + $0x2c] sm:$0xf] %v459
                  %v461 = vld [vmem:[%s435 + $0x30] sm:$0xf]
                  %462 = vst [vmem:[%s436 + $0x30] sm:$0xf] %v461
                  %v463 = vld [vmem:[%s435 + $0x34] sm:$0xf]
                  %464 = vst [vmem:[%s436 + $0x34] sm:$0xf] %v463
                  %v465 = vld [vmem:[%s435 + $0x38] sm:$0xf]
                  %466 = vst [vmem:[%s436 + $0x38] sm:$0xf] %v465
                  %v467 = vld [vmem:[%s435 + $0x3c] sm:$0xf]
                  %468 = vst [vmem:[%s436 + $0x3c] sm:$0xf] %v467
                  %v469 = vld [vmem:[%s435 + $0x98] sm:$0xf]
                  %470 = vst [vmem:[%s436 + $0x40] sm:$0xf] %v469
                  %v471 = vld [vmem:[%s435 + $0x9c] sm:$0xf]
                  %472 = vst [vmem:[%s436 + $0x44] sm:$0xf] %v471
                  %v473 = vld [vmem:[%s435 + $0xa0] sm:$0xf]
                  %474 = vst [vmem:[%s436 + $0x48] sm:$0xf] %v473
                  %v475 = vld [vmem:[%s435 + $0xa4] sm:$0xf]
                  %476 = vst [vmem:[%s436 + $0x4c] sm:$0xf] %v475
                  %v477 = vld [vmem:[%s435 + $0xa8] sm:$0xf]
                  %478 = vst [vmem:[%s436 + $0x50] sm:$0xf] %v477
                  %v479 = vld [vmem:[%s435 + $0xac] sm:$0xf]
                  %480 = vst [vmem:[%s436 + $0x54] sm:$0xf] %v479
                  %v481 = vld [vmem:[%s435 + $0xb0] sm:$0xf]
                  %482 = vst [vmem:[%s436 + $0x58] sm:$0xf] %v481
                  %v483 = vld [vmem:[%s435 + $0xb4] sm:$0xf]
                  %484 = vst [vmem:[%s436 + $0x5c] sm:$0xf] %v483
                  %v485 = vld [vmem:[%s435 + $0xb8] sm:$0xf]
                  %486 = vst [vmem:[%s436 + $0x60] sm:$0xf] %v485
                  %v487 = vld [vmem:[%s435 + $0xbc] sm:$0xf]
                  %488 = vst [vmem:[%s436 + $0x64] sm:$0xf] %v487
                  %v489 = vld [vmem:[%s435 + $0xc0] sm:$0xf]
                  %490 = vst [vmem:[%s436 + $0x68] sm:$0xf] %v489
                  %v491 = vld [vmem:[%s435 + $0xc4] sm:$0xf]
                  %492 = vst [vmem:[%s436 + $0x6c] sm:$0xf] %v491
                  %v493 = vld [vmem:[%s435 + $0xc8] sm:$0xf]
                  %494 = vst [vmem:[%s436 + $0x70] sm:$0xf] %v493
                  %v495 = vld [vmem:[%s435 + $0xcc] sm:$0xf]
                  %496 = vst [vmem:[%s436 + $0x74] sm:$0xf] %v495
                  %v497 = vld [vmem:[%s435 + $0xd0] sm:$0xf]
                  %498 = vst [vmem:[%s436 + $0x78] sm:$0xf] %v497
                  %v499 = vld [vmem:[%s435 + $0xd4] sm:$0xf]
                  %500 = vst [vmem:[%s436 + $0x7c] sm:$0xf] %v499
                  %v501 = vld [vmem:[%s435 + $0x130] sm:$0xf]
                  %502 = vst [vmem:[%s436 + $0x80] sm:$0xf] %v501
                  %v503 = vld [vmem:[%s435 + $0x134] sm:$0xf]
                  %504 = vst [vmem:[%s436 + $0x84] sm:$0xf] %v503
                  %v505 = vld [vmem:[%s435 + $0x138] sm:$0xf]
                  %506 = vst [vmem:[%s436 + $0x88] sm:$0xf] %v505
                  %v507 = vld [vmem:[%s435 + $0x13c] sm:$0xf]
                  %508 = vst [vmem:[%s436 + $0x8c] sm:$0xf] %v507
                  %v509 = vld [vmem:[%s435 + $0x140] sm:$0xf]
                  %510 = vst [vmem:[%s436 + $0x90] sm:$0xf] %v509
                  %v511 = vld [vmem:[%s435 + $0x144] sm:$0xf]
                  %512 = vst [vmem:[%s436 + $0x94] sm:$0xf] %v511
                  %v513 = vld [vmem:[%s435 + $0x148] sm:$0xf]
                  %514 = vst [vmem:[%s436 + $0x98] sm:$0xf] %v513
                  %v515 = vld [vmem:[%s435 + $0x14c] sm:$0xf]
                  %516 = vst [vmem:[%s436 + $0x9c] sm:$0xf] %v515
                  %v517 = vld [vmem:[%s435 + $0x150] sm:$0xf]
                  %518 = vst [vmem:[%s436 + $0xa0] sm:$0xf] %v517
                  %v519 = vld [vmem:[%s435 + $0x154] sm:$0xf]
                  %520 = vst [vmem:[%s436 + $0xa4] sm:$0xf] %v519
                  %v521 = vld [vmem:[%s435 + $0x158] sm:$0xf]
                  %522 = vst [vmem:[%s436 + $0xa8] sm:$0xf] %v521
                  %v523 = vld [vmem:[%s435 + $0x15c] sm:$0xf]
                  %524 = vst [vmem:[%s436 + $0xac] sm:$0xf] %v523
                  %v525 = vld [vmem:[%s435 + $0x160] sm:$0xf]
                  %526 = vst [vmem:[%s436 + $0xb0] sm:$0xf] %v525
                  %v527 = vld [vmem:[%s435 + $0x164] sm:$0xf]
                  %528 = vst [vmem:[%s436 + $0xb4] sm:$0xf] %v527
                  %v529 = vld [vmem:[%s435 + $0x168] sm:$0xf]
                  %530 = vst [vmem:[%s436 + $0xb8] sm:$0xf] %v529
                  %v531 = vld [vmem:[%s435 + $0x16c] sm:$0xf]
                  %532 = vst [vmem:[%s436 + $0xbc] sm:$0xf] %v531
                  %s533 = sadd.s32 1, %s434
                  %p534 = scmp.ge.s32.totalorder %s533, %s427
                  %s535 = scalar_select %p534, 0, %s533
                  %s536 = smul.u32 %s535, 64
                  %s537 = smul.u32 %s535, 64
                  %s538 = scalar_lea.vmem %s233, %s536
                  %s539 = scalar_lea.vmem %s225, %s537 [#allocation2]
                $region85: #{tpu_custom_call.1} parent=65 // loop_footer
                  %s431 = sadd.s32 %s429, 1
                $region86: #{tpu_custom_call.1} parent=65 // loop_footer_branch
                  %428 = sbr.rel target = $region82
                $region87: #{tpu_custom_call.1} parent=65 // loop_exit
                  _
                %s540 = sshrl.u32 %s229, 4
                %s541 = sand.u32 %s229, 15
                %s542 = smul.u32 %s540, 16
                %s543 = smul.u32 4, %s542
                %s544 = scalar_lea.vmem %s233, %s543
                %s545 = smul.u32 4, %s542
                %s546 = scalar_lea.vmem %s225, %s545 [#allocation2]
                // While loop
                $region88: #{tpu_custom_call.1} parent=65 // loop_pre_header
                  _
                $region89: #{tpu_custom_call.1} parent=65 // loop_header
                  %s548 = sphi 0, %s550
                  %p549 = scmp.ge.s32.totalorder %s548, %s541
                  %s553 = sphi 0, %s564
                  %s554 = sphi %s544, %s567
                  %s555 = sphi %s546, %s568
                $region90: #{tpu_custom_call.1} parent=65 // loop_header_branch
                  %552 = sbr.rel (%p549) target = $region94
                $region91: #{tpu_custom_call.1} parent=65 // loop_body
                  %v556 = vld [vmem:[%s554] sm:$0xf]
                  %557 = vst [vmem:[%s555] sm:$0xf] %v556
                  %v558 = vld [vmem:[%s554 + $0x98] sm:$0xf]
                  %559 = vst [vmem:[%s555 + $0x40] sm:$0xf] %v558
                  %v560 = vld [vmem:[%s554 + $0x130] sm:$0xf]
                  %561 = vst [vmem:[%s555 + $0x80] sm:$0xf] %v560
                  %s562 = sadd.s32 1, %s553
                  %p563 = scmp.ge.s32.totalorder %s562, %s541
                  %s564 = scalar_select %p563, 0, %s562
                  %s565 = smul.u32 %s564, 4
                  %s566 = smul.u32 %s564, 4
                  %s567 = scalar_lea.vmem %s544, %s565
                  %s568 = scalar_lea.vmem %s546, %s566 [#allocation2]
                $region92: #{tpu_custom_call.1} parent=65 // loop_footer
                  %s550 = sadd.s32 %s548, 1
                $region93: #{tpu_custom_call.1} parent=65 // loop_footer_branch
                  %547 = sbr.rel target = $region89
                $region94: #{tpu_custom_call.1} parent=65 // loop_exit
                  _
              $region66: #{tpu_custom_call.1} parent=43 // pred_fallthru
                _
            $region44: #{tpu_custom_call.1} parent=39 // pred_fallthru
              _
            // Predicated region
            $region45: #{tpu_custom_call.1} parent=39 // pred_check
              _
            $region46: #{tpu_custom_call.1} parent=39 // pred_check_branch
              %240 = sbr.rel (0) target = $region48
            $region47: #{tpu_custom_call.1} parent=39 // pred_region
              %s242 = sshrl.u32 %s229, 4
              // While loop
              $region49: #{tpu_custom_call.1} parent=47 // loop_pre_header
                _
              $region50: #{tpu_custom_call.1} parent=47 // loop_header
                %s244 = sphi 0, %s246
                %p245 = scmp.ge.s32.totalorder %s244, %s242
                %s249 = sphi 0, %s350
                %s250 = sphi %s233, %s353
                %s251 = sphi %s225, %s354
              $region51: #{tpu_custom_call.1} parent=47 // loop_header_branch
                %248 = sbr.rel (%p245) target = $region55
              $region52: #{tpu_custom_call.1} parent=47 // loop_body
                %v252 = vld [vmem:[%s250] sm:$0xf]
                %253 = vst [vmem:[%s251] sm:$0xf] %v252
                %v254 = vld [vmem:[%s250 + $0x4] sm:$0xf]
                %255 = vst [vmem:[%s251 + $0x4] sm:$0xf] %v254
                %v256 = vld [vmem:[%s250 + $0x8] sm:$0xf]
                %257 = vst [vmem:[%s251 + $0x8] sm:$0xf] %v256
                %v258 = vld [vmem:[%s250 + $0xc] sm:$0xf]
                %259 = vst [vmem:[%s251 + $0xc] sm:$0xf] %v258
                %v260 = vld [vmem:[%s250 + $0x10] sm:$0xf]
                %261 = vst [vmem:[%s251 + $0x10] sm:$0xf] %v260
                %v262 = vld [vmem:[%s250 + $0x14] sm:$0xf]
                %263 = vst [vmem:[%s251 + $0x14] sm:$0xf] %v262
                %v264 = vld [vmem:[%s250 + $0x18] sm:$0xf]
                %265 = vst [vmem:[%s251 + $0x18] sm:$0xf] %v264
                %v266 = vld [vmem:[%s250 + $0x1c] sm:$0xf]
                %267 = vst [vmem:[%s251 + $0x1c] sm:$0xf] %v266
                %v268 = vld [vmem:[%s250 + $0x20] sm:$0xf]
                %269 = vst [vmem:[%s251 + $0x20] sm:$0xf] %v268
                %v270 = vld [vmem:[%s250 + $0x24] sm:$0xf]
                %271 = vst [vmem:[%s251 + $0x24] sm:$0xf] %v270
                %v272 = vld [vmem:[%s250 + $0x28] sm:$0xf]
                %273 = vst [vmem:[%s251 + $0x28] sm:$0xf] %v272
                %v274 = vld [vmem:[%s250 + $0x2c] sm:$0xf]
                %275 = vst [vmem:[%s251 + $0x2c] sm:$0xf] %v274
                %v276 = vld [vmem:[%s250 + $0x30] sm:$0xf]
                %277 = vst [vmem:[%s251 + $0x30] sm:$0xf] %v276
                %v278 = vld [vmem:[%s250 + $0x34] sm:$0xf]
                %279 = vst [vmem:[%s251 + $0x34] sm:$0xf] %v278
                %v280 = vld [vmem:[%s250 + $0x38] sm:$0xf]
                %281 = vst [vmem:[%s251 + $0x38] sm:$0xf] %v280
                %v282 = vld [vmem:[%s250 + $0x3c] sm:$0xf]
                %283 = vst [vmem:[%s251 + $0x3c] sm:$0xf] %v282
                %v284 = vld [vmem:[%s250 + $0x98] sm:$0xf]
                %285 = vst [vmem:[%s251 + $0x40] sm:$0xf] %v284
                %v286 = vld [vmem:[%s250 + $0x9c] sm:$0xf]
                %287 = vst [vmem:[%s251 + $0x44] sm:$0xf] %v286
                %v288 = vld [vmem:[%s250 + $0xa0] sm:$0xf]
                %289 = vst [vmem:[%s251 + $0x48] sm:$0xf] %v288
                %v290 = vld [vmem:[%s250 + $0xa4] sm:$0xf]
                %291 = vst [vmem:[%s251 + $0x4c] sm:$0xf] %v290
                %v292 = vld [vmem:[%s250 + $0xa8] sm:$0xf]
                %293 = vst [vmem:[%s251 + $0x50] sm:$0xf] %v292
                %v294 = vld [vmem:[%s250 + $0xac] sm:$0xf]
                %295 = vst [vmem:[%s251 + $0x54] sm:$0xf] %v294
                %v296 = vld [vmem:[%s250 + $0xb0] sm:$0xf]
                %297 = vst [vmem:[%s251 + $0x58] sm:$0xf] %v296
                %v298 = vld [vmem:[%s250 + $0xb4] sm:$0xf]
                %299 = vst [vmem:[%s251 + $0x5c] sm:$0xf] %v298
                %v300 = vld [vmem:[%s250 + $0xb8] sm:$0xf]
                %301 = vst [vmem:[%s251 + $0x60] sm:$0xf] %v300
                %v302 = vld [vmem:[%s250 + $0xbc] sm:$0xf]
                %303 = vst [vmem:[%s251 + $0x64] sm:$0xf] %v302
                %v304 = vld [vmem:[%s250 + $0xc0] sm:$0xf]
                %305 = vst [vmem:[%s251 + $0x68] sm:$0xf] %v304
                %v306 = vld [vmem:[%s250 + $0xc4] sm:$0xf]
                %307 = vst [vmem:[%s251 + $0x6c] sm:$0xf] %v306
                %v308 = vld [vmem:[%s250 + $0xc8] sm:$0xf]
                %309 = vst [vmem:[%s251 + $0x70] sm:$0xf] %v308
                %v310 = vld [vmem:[%s250 + $0xcc] sm:$0xf]
                %311 = vst [vmem:[%s251 + $0x74] sm:$0xf] %v310
                %v312 = vld [vmem:[%s250 + $0xd0] sm:$0xf]
                %313 = vst [vmem:[%s251 + $0x78] sm:$0xf] %v312
                %v314 = vld [vmem:[%s250 + $0xd4] sm:$0xf]
                %315 = vst [vmem:[%s251 + $0x7c] sm:$0xf] %v314
                %v316 = vld [vmem:[%s250 + $0x130] sm:$0xf]
                %317 = vst [vmem:[%s251 + $0x80] sm:$0xf] %v316
                %v318 = vld [vmem:[%s250 + $0x134] sm:$0xf]
                %319 = vst [vmem:[%s251 + $0x84] sm:$0xf] %v318
                %v320 = vld [vmem:[%s250 + $0x138] sm:$0xf]
                %321 = vst [vmem:[%s251 + $0x88] sm:$0xf] %v320
                %v322 = vld [vmem:[%s250 + $0x13c] sm:$0xf]
                %323 = vst [vmem:[%s251 + $0x8c] sm:$0xf] %v322
                %v324 = vld [vmem:[%s250 + $0x140] sm:$0xf]
                %325 = vst [vmem:[%s251 + $0x90] sm:$0xf] %v324
                %v326 = vld [vmem:[%s250 + $0x144] sm:$0xf]
                %327 = vst [vmem:[%s251 + $0x94] sm:$0xf] %v326
                %v328 = vld [vmem:[%s250 + $0x148] sm:$0xf]
                %329 = vst [vmem:[%s251 + $0x98] sm:$0xf] %v328
                %v330 = vld [vmem:[%s250 + $0x14c] sm:$0xf]
                %331 = vst [vmem:[%s251 + $0x9c] sm:$0xf] %v330
                %v332 = vld [vmem:[%s250 + $0x150] sm:$0xf]
                %333 = vst [vmem:[%s251 + $0xa0] sm:$0xf] %v332
                %v334 = vld [vmem:[%s250 + $0x154] sm:$0xf]
                %335 = vst [vmem:[%s251 + $0xa4] sm:$0xf] %v334
                %v336 = vld [vmem:[%s250 + $0x158] sm:$0xf]
                %337 = vst [vmem:[%s251 + $0xa8] sm:$0xf] %v336
                %v338 = vld [vmem:[%s250 + $0x15c] sm:$0xf]
                %339 = vst [vmem:[%s251 + $0xac] sm:$0xf] %v338
                %v340 = vld [vmem:[%s250 + $0x160] sm:$0xf]
                %341 = vst [vmem:[%s251 + $0xb0] sm:$0xf] %v340
                %v342 = vld [vmem:[%s250 + $0x164] sm:$0xf]
                %343 = vst [vmem:[%s251 + $0xb4] sm:$0xf] %v342
                %v344 = vld [vmem:[%s250 + $0x168] sm:$0xf]
                %345 = vst [vmem:[%s251 + $0xb8] sm:$0xf] %v344
                %v346 = vld [vmem:[%s250 + $0x16c] sm:$0xf]
                %347 = vst [vmem:[%s251 + $0xbc] sm:$0xf] %v346
                %s348 = sadd.s32 1, %s249
                %p349 = scmp.ge.s32.totalorder %s348, %s242
                %s350 = scalar_select %p349, 0, %s348
                %s351 = smul.u32 %s350, 64
                %s352 = smul.u32 %s350, 64
                %s353 = scalar_lea.vmem %s233, %s351
                %s354 = scalar_lea.vmem %s225, %s352 [#allocation2]
              $region53: #{tpu_custom_call.1} parent=47 // loop_footer
                %s246 = sadd.s32 %s244, 1
              $region54: #{tpu_custom_call.1} parent=47 // loop_footer_branch
                %243 = sbr.rel target = $region50
              $region55: #{tpu_custom_call.1} parent=47 // loop_exit
                _
              %s355 = sshrl.u32 %s229, 4
              %s356 = sand.u32 %s229, 15
              %s357 = smul.u32 %s355, 16
              %s358 = smul.u32 4, %s357
              %s359 = scalar_lea.vmem %s233, %s358
              %s360 = smul.u32 4, %s357
              %s361 = scalar_lea.vmem %s225, %s360 [#allocation2]
              // While loop
              $region56: #{tpu_custom_call.1} parent=47 // loop_pre_header
                _
              $region57: #{tpu_custom_call.1} parent=47 // loop_header
                %s363 = sphi 0, %s365
                %p364 = scmp.ge.s32.totalorder %s363, %s356
                %s368 = sphi 0, %s379
                %s369 = sphi %s359, %s382
                %s370 = sphi %s361, %s383
              $region58: #{tpu_custom_call.1} parent=47 // loop_header_branch
                %367 = sbr.rel (%p364) target = $region62
              $region59: #{tpu_custom_call.1} parent=47 // loop_body
                %v371 = vld [vmem:[%s369] sm:$0xf]
                %372 = vst [vmem:[%s370] sm:$0xf] %v371
                %v373 = vld [vmem:[%s369 + $0x98] sm:$0xf]
                %374 = vst [vmem:[%s370 + $0x40] sm:$0xf] %v373
                %v375 = vld [vmem:[%s369 + $0x130] sm:$0xf]
                %376 = vst [vmem:[%s370 + $0x80] sm:$0xf] %v375
                %s377 = sadd.s32 1, %s368
                %p378 = scmp.ge.s32.totalorder %s377, %s356
                %s379 = scalar_select %p378, 0, %s377
                %s380 = smul.u32 %s379, 4
                %s381 = smul.u32 %s379, 4
                %s382 = scalar_lea.vmem %s359, %s380
                %s383 = scalar_lea.vmem %s361, %s381 [#allocation2]
              $region60: #{tpu_custom_call.1} parent=47 // loop_footer
                %s365 = sadd.s32 %s363, 1
              $region61: #{tpu_custom_call.1} parent=47 // loop_footer_branch
                %362 = sbr.rel target = $region57
              $region62: #{tpu_custom_call.1} parent=47 // loop_exit
                _
            $region48: #{tpu_custom_call.1} parent=39 // pred_fallthru
              _
          $region40: #{tpu_custom_call.1} parent=35 // pred_fallthru
            _
          %569 = vnop
        $region36: #{tpu_custom_call.1} parent=23 // pred_fallthru
          _
      $region24: #{tpu_custom_call.1} parent=5 // pred_fallthru
        _
      %p570 = scmp.le.s32.totalorder 1, %s14
      %p571 = scmp.lt.s32.totalorder %s14, 4
      %p572 = pnand %p570, %p571
      %p573 = pneg %p572
      // Predicated region
      $region95: #{tpu_custom_call.1} parent=5 // pred_check
        _
      $region96: #{tpu_custom_call.1} parent=5 // pred_check_branch
        %575 = sbr.rel (%p572) target = $region98
      $region97: #{tpu_custom_call.1} parent=5 // pred_region
        %s576 = ssub.s32 %s14, 1
        %s577 = sand.u32 %s121, 1
        %s578 = sand.u32 %s121, 1
        %s579 = smul.addr %s578, 192
        %s580 = scalar_lea.vmem [#allocation2], %s579
        // Predicated region
        $region99: #{tpu_custom_call.1} parent=97 // pred_check
          %p581 = pneg %p134
        $region100: #{tpu_custom_call.1} parent=97 // pred_check_branch
          %583 = sbr.rel (%p581) target = $region102
        $region101: #{tpu_custom_call.1} parent=97 // pred_region
          _
        $region102: #{tpu_custom_call.1} parent=97 // pred_fallthru
          _
        %p584 = pneg %p35
        %p585 = pneg %p32
        %p586 = pneg %p56
        %p587 = pneg %p53
        %s588 = smul.u32 16, %s19
        %s589 = ssub.s32 38, %s588
        %p590 = scmp.lt.s32.totalorder %s589, 16
        %s591 = scalar_select %p590, %s589, 16
        %s592 = smul.u32 128, %s591
        %p593 = scmp.lt.s32.totalorder %s588, 37
        %s594 = scalar_select %p593, %s588, 37
        %s595 = smul.addr %s594, 8
        %s596 = scalar_lea.vmem %s2, %s595
        %p597 = pneg %p82
        %p598 = pneg %p79
        %s599 = smul.u32 16, %s19
        %s600 = ssub.s32 38, %s599
        %p601 = scmp.lt.s32.totalorder %s600, 16
        %s602 = scalar_select %p601, %s600, 16
        %s603 = smul.u32 128, %s602
        %p604 = scmp.lt.s32.totalorder %s599, 37
        %s605 = scalar_select %p604, %s599, 37
        %s606 = smul.addr %s605, 8
        %s607 = scalar_lea.vmem %s3, %s606
        %p608 = pneg %p108
        %p609 = pneg %p105
        %s610 = sand.u32 %s121, 1
        %s611 = sand.u32 %s121, 1
        %s612 = smul.addr %s611, 192
        %s613 = scalar_lea.vmem [#allocation2], %s612
        %p614 = pneg %p134
        %p615 = pneg %p131
        %p616 = pneg %p160
        %p617 = pneg %p157
        %s618 = sand.u32 %s147, 1
        %s619 = scalar_lea.sflag [#allocation4], %s618
        %s620 = sand.u32 %s147, 1
        %s621 = smul.addr %s620, 4
        %s622 = scalar_lea.vmem [#allocation3], %s621
        %s623 = smul.u32 16, %s19
        %s624 = ssub.s32 38, %s623
        %p625 = scmp.lt.s32.totalorder %s624, 16
        %s626 = scalar_select %p625, %s624, 16
        %s627 = smul.u32 128, %s626
        %p628 = scmp.lt.s32.totalorder %s623, 37
        %s629 = scalar_select %p628, %s623, 37
        %s630 = smul.addr %s629, 8
        %s631 = scalar_lea.vmem %s2, %s630
        %s632 = smul.u32 16, %s19
        %s633 = ssub.s32 38, %s632
        %p634 = scmp.lt.s32.totalorder %s633, 16
        %s635 = scalar_select %p634, %s633, 16
        %s636 = smul.u32 128, %s635
        %s637 = smul.u32 16, %s19
        %s638 = ssub.s32 38, %s637
        %p639 = scmp.lt.s32.totalorder %s638, 16
        %s640 = scalar_select %p639, %s638, 16
        %s641 = smul.u32 128, %s640
        %p642 = scmp.lt.s32.totalorder %s637, 37
        %s643 = scalar_select %p642, %s637, 37
        %s644 = smul.addr %s643, 8
        %s645 = scalar_lea.vmem %s3, %s644
        %s646 = smul.u32 16, %s19
        %s647 = ssub.s32 38, %s646
        %p648 = scmp.lt.s32.totalorder %s647, 16
        %s649 = scalar_select %p648, %s647, 16
        %s650 = smul.u32 128, %s649
        %s651 = smul.u32 16, %s19
        %s652 = ssub.s32 38, %s651
        %p653 = scmp.lt.s32.totalorder %s652, 16
        %s654 = scalar_select %p653, %s652, 16
        %s655 = smul.u32 192, %s654
        %v656 = vld [vmem:[%s631] sm:$0xff]
        %v657 = vld [vmem:[%s631 + $0x8] sm:$0xff]
        %v658 = vld [vmem:[%s631 + $0x10] sm:$0xff]
        %v659 = vld [vmem:[%s631 + $0x18] sm:$0xff]
        %v660 = vld [vmem:[%s631 + $0x20] sm:$0xff]
        %v661 = vld [vmem:[%s631 + $0x28] sm:$0xff]
        %v662 = vld [vmem:[%s631 + $0x30] sm:$0xff]
        %v663 = vld [vmem:[%s631 + $0x38] sm:$0xff]
        %v664 = vld [vmem:[%s631 + $0x40] sm:$0xff]
        %v665 = vld [vmem:[%s631 + $0x48] sm:$0xff]
        %v666 = vld [vmem:[%s631 + $0x50] sm:$0xff]
        %v667 = vld [vmem:[%s631 + $0x58] sm:$0xff]
        %v668 = vld [vmem:[%s631 + $0x60] sm:$0xff]
        %v669 = vld [vmem:[%s631 + $0x68] sm:$0xff]
        %v670 = vld [vmem:[%s631 + $0x70] sm:$0xff]
        %v671 = vld [vmem:[%s631 + $0x78] sm:$0xff]
        %v672 = vld [vmem:[%s645] sm:$0xff]
        %v673 = vld [vmem:[%s645 + $0x8] sm:$0xff]
        %v674 = vld [vmem:[%s645 + $0x10] sm:$0xff]
        %v675 = vld [vmem:[%s645 + $0x18] sm:$0xff]
        %v676 = vld [vmem:[%s645 + $0x20] sm:$0xff]
        %v677 = vld [vmem:[%s645 + $0x28] sm:$0xff]
        %v678 = vld [vmem:[%s645 + $0x30] sm:$0xff]
        %v679 = vld [vmem:[%s645 + $0x38] sm:$0xff]
        %v680 = vld [vmem:[%s645 + $0x40] sm:$0xff]
        %v681 = vld [vmem:[%s645 + $0x48] sm:$0xff]
        %v682 = vld [vmem:[%s645 + $0x50] sm:$0xff]
        %v683 = vld [vmem:[%s645 + $0x58] sm:$0xff]
        %v684 = vld [vmem:[%s645 + $0x60] sm:$0xff]
        %v685 = vld [vmem:[%s645 + $0x68] sm:$0xff]
        %v686 = vld [vmem:[%s645 + $0x70] sm:$0xff]
        %v687 = vld [vmem:[%s645 + $0x78] sm:$0xff]
        %v688 = vld [vmem:[%s580] sm:$0xf]
        %v689 = vld [vmem:[%s580 + $0x4] sm:$0xf]
        %v690 = vld [vmem:[%s580 + $0x8] sm:$0xf]
        %v691 = vld [vmem:[%s580 + $0xc] sm:$0xf]
        %v692 = vld [vmem:[%s580 + $0x10] sm:$0xf]
        %v693 = vld [vmem:[%s580 + $0x14] sm:$0xf]
        %v694 = vld [vmem:[%s580 + $0x18] sm:$0xf]
        %v695 = vld [vmem:[%s580 + $0x1c] sm:$0xf]
        %v696 = vld [vmem:[%s580 + $0x20] sm:$0xf]
        %v697 = vld [vmem:[%s580 + $0x24] sm:$0xf]
        %v698 = vld [vmem:[%s580 + $0x28] sm:$0xf]
        %v699 = vld [vmem:[%s580 + $0x2c] sm:$0xf]
        %v700 = vld [vmem:[%s580 + $0x30] sm:$0xf]
        %v701 = vld [vmem:[%s580 + $0x34] sm:$0xf]
        %v702 = vld [vmem:[%s580 + $0x38] sm:$0xf]
        %v703 = vld [vmem:[%s580 + $0x3c] sm:$0xf]
        %v704 = vld [vmem:[%s580 + $0x40] sm:$0xf]
        %v705 = vld [vmem:[%s580 + $0x44] sm:$0xf]
        %v706 = vld [vmem:[%s580 + $0x48] sm:$0xf]
        %v707 = vld [vmem:[%s580 + $0x4c] sm:$0xf]
        %v708 = vld [vmem:[%s580 + $0x50] sm:$0xf]
        %v709 = vld [vmem:[%s580 + $0x54] sm:$0xf]
        %v710 = vld [vmem:[%s580 + $0x58] sm:$0xf]
        %v711 = vld [vmem:[%s580 + $0x5c] sm:$0xf]
        %v712 = vld [vmem:[%s580 + $0x60] sm:$0xf]
        %v713 = vld [vmem:[%s580 + $0x64] sm:$0xf]
        %v714 = vld [vmem:[%s580 + $0x68] sm:$0xf]
        %v715 = vld [vmem:[%s580 + $0x6c] sm:$0xf]
        %v716 = vld [vmem:[%s580 + $0x70] sm:$0xf]
        %v717 = vld [vmem:[%s580 + $0x74] sm:$0xf]
        %v718 = vld [vmem:[%s580 + $0x78] sm:$0xf]
        %v719 = vld [vmem:[%s580 + $0x7c] sm:$0xf]
        %v720 = vld [vmem:[%s580 + $0x80] sm:$0xf]
        %v721 = vld [vmem:[%s580 + $0x84] sm:$0xf]
        %v722 = vld [vmem:[%s580 + $0x88] sm:$0xf]
        %v723 = vld [vmem:[%s580 + $0x8c] sm:$0xf]
        %v724 = vld [vmem:[%s580 + $0x90] sm:$0xf]
        %v725 = vld [vmem:[%s580 + $0x94] sm:$0xf]
        %v726 = vld [vmem:[%s580 + $0x98] sm:$0xf]
        %v727 = vld [vmem:[%s580 + $0x9c] sm:$0xf]
        %v728 = vld [vmem:[%s580 + $0xa0] sm:$0xf]
        %v729 = vld [vmem:[%s580 + $0xa4] sm:$0xf]
        %v730 = vld [vmem:[%s580 + $0xa8] sm:$0xf]
        %v731 = vld [vmem:[%s580 + $0xac] sm:$0xf]
        %v732 = vld [vmem:[%s580 + $0xb0] sm:$0xf]
        %v733 = vld [vmem:[%s580 + $0xb4] sm:$0xf]
        %v734 = vld [vmem:[%s580 + $0xb8] sm:$0xf]
        %v735 = vld [vmem:[%s580 + $0xbc] sm:$0xf]
        %v736 = vunpack.c.l.bf16 %v688
        %v737 = vunpack.c.l.bf16 %v689
        %v738 = vunpack.c.l.bf16 %v690
        %v739 = vunpack.c.l.bf16 %v691
        %v740 = vunpack.c.l.bf16 %v692
        %v741 = vunpack.c.l.bf16 %v693
        %v742 = vunpack.c.l.bf16 %v694
        %v743 = vunpack.c.l.bf16 %v695
        %v744 = vunpack.c.l.bf16 %v696
        %v745 = vunpack.c.l.bf16 %v697
        %v746 = vunpack.c.l.bf16 %v698
        %v747 = vunpack.c.l.bf16 %v699
        %v748 = vunpack.c.l.bf16 %v700
        %v749 = vunpack.c.l.bf16 %v701
        %v750 = vunpack.c.l.bf16 %v702
        %v751 = vunpack.c.l.bf16 %v703
        %v752 = vunpack.c.l.bf16 %v704
        %v753 = vunpack.c.l.bf16 %v705
        %v754 = vunpack.c.l.bf16 %v706
        %v755 = vunpack.c.l.bf16 %v707
        %v756 = vunpack.c.l.bf16 %v708
        %v757 = vunpack.c.l.bf16 %v709
        %v758 = vunpack.c.l.bf16 %v710
        %v759 = vunpack.c.l.bf16 %v711
        %v760 = vunpack.c.l.bf16 %v712
        %v761 = vunpack.c.l.bf16 %v713
        %v762 = vunpack.c.l.bf16 %v714
        %v763 = vunpack.c.l.bf16 %v715
        %v764 = vunpack.c.l.bf16 %v716
        %v765 = vunpack.c.l.bf16 %v717
        %v766 = vunpack.c.l.bf16 %v718
        %v767 = vunpack.c.l.bf16 %v719
        %v768 = vunpack.c.l.bf16 %v720
        %v769 = vunpack.c.l.bf16 %v721
        %v770 = vunpack.c.l.bf16 %v722
        %v771 = vunpack.c.l.bf16 %v723
        %v772 = vunpack.c.l.bf16 %v724
        %v773 = vunpack.c.l.bf16 %v725
        %v774 = vunpack.c.l.bf16 %v726
        %v775 = vunpack.c.l.bf16 %v727
        %v776 = vunpack.c.l.bf16 %v728
        %v777 = vunpack.c.l.bf16 %v729
        %v778 = vunpack.c.l.bf16 %v730
        %v779 = vunpack.c.l.bf16 %v731
        %v780 = vunpack.c.l.bf16 %v732
        %v781 = vunpack.c.l.bf16 %v733
        %v782 = vunpack.c.l.bf16 %v734
        %v783 = vunpack.c.l.bf16 %v735
        %v784 = vld [vmem:[%s0] sm:$0xff]
        %v785 = vld [vmem:[%s0 + $0x8] sm:$0xff]
        %v786 = vld [vmem:[%s0 + $0x10] sm:$0xff]
        %v787 = vld [vmem:[%s0 + $0x18] sm:$0xff]
        %v788 = vld [vmem:[%s0 + $0x20] sm:$0xff]
        %v789 = vld [vmem:[%s0 + $0x28] sm:$0xff]
        %v790 = vld [vmem:[%s0 + $0x30] sm:$0xff]
        %v791 = vld [vmem:[%s0 + $0x38] sm:$0xff]
        %v792 = vld [vmem:[%s1] sm:$0x1]
        %v793 = vand.u32 2147483647, %v672
        %v794 = vand.u32 2147483647, %v673
        %v795 = vand.u32 2147483647, %v674
        %v796 = vand.u32 2147483647, %v675
        %v797 = vand.u32 2147483647, %v676
        %v798 = vand.u32 2147483647, %v677
        %v799 = vand.u32 2147483647, %v678
        %v800 = vand.u32 2147483647, %v679
        %v801 = vand.u32 2147483647, %v680
        %v802 = vand.u32 2147483647, %v681
        %v803 = vand.u32 2147483647, %v682
        %v804 = vand.u32 2147483647, %v683
        %v805 = vand.u32 2147483647, %v684
        %v806 = vand.u32 2147483647, %v685
        %v807 = vand.u32 2147483647, %v686
        %v808 = vand.u32 2147483647, %v687
        %v809 = vsub.f32 0.0, %v793
        %v810 = vsub.f32 0.0, %v794
        %v811 = vsub.f32 0.0, %v795
        %v812 = vsub.f32 0.0, %v796
        %v813 = vsub.f32 0.0, %v797
        %v814 = vsub.f32 0.0, %v798
        %v815 = vsub.f32 0.0, %v799
        %v816 = vsub.f32 0.0, %v800
        %v817 = vsub.f32 0.0, %v801
        %v818 = vsub.f32 0.0, %v802
        %v819 = vsub.f32 0.0, %v803
        %v820 = vsub.f32 0.0, %v804
        %v821 = vsub.f32 0.0, %v805
        %v822 = vsub.f32 0.0, %v806
        %v823 = vsub.f32 0.0, %v807
        %v824 = vsub.f32 0.0, %v808
        %v825 = vmul.f32 %v809, 20.0
        %v826 = vmul.f32 %v810, 20.0
        %v827 = vmul.f32 %v811, 20.0
        %v828 = vmul.f32 %v812, 20.0
        %v829 = vmul.f32 %v813, 20.0
        %v830 = vmul.f32 %v814, 20.0
        %v831 = vmul.f32 %v815, 20.0
        %v832 = vmul.f32 %v816, 20.0
        %v833 = vmul.f32 %v817, 20.0
        %v834 = vmul.f32 %v818, 20.0
        %v835 = vmul.f32 %v819, 20.0
        %v836 = vmul.f32 %v820, 20.0
        %v837 = vmul.f32 %v821, 20.0
        %v838 = vmul.f32 %v822, 20.0
        %v839 = vmul.f32 %v823, 20.0
        %v840 = vmul.f32 %v824, 20.0
        %v841 = vmul.f32 %v825, 1.442695
        %v842 = vpow.pop %v841
        %v843 = vmul.f32 %v826, 1.442695
        %v844 = vpow.pop %v843
        %v845 = vmul.f32 %v827, 1.442695
        %v846 = vpow.pop %v845
        %v847 = vmul.f32 %v828, 1.442695
        %v848 = vpow.pop %v847
        %v849 = vmul.f32 %v829, 1.442695
        %v850 = vpow.pop %v849
        %v851 = vmul.f32 %v830, 1.442695
        %v852 = vpow.pop %v851
        %v853 = vmul.f32 %v831, 1.442695
        %v854 = vpow.pop %v853
        %v855 = vmul.f32 %v832, 1.442695
        %v856 = vpow.pop %v855
        %v857 = vmul.f32 %v833, 1.442695
        %v858 = vpow.pop %v857
        %v859 = vmul.f32 %v834, 1.442695
        %v860 = vpow.pop %v859
        %v861 = vmul.f32 %v835, 1.442695
        %v862 = vpow.pop %v861
        %v863 = vmul.f32 %v836, 1.442695
        %v864 = vpow.pop %v863
        %v865 = vmul.f32 %v837, 1.442695
        %v866 = vpow.pop %v865
        %v867 = vmul.f32 %v838, 1.442695
        %v868 = vpow.pop %v867
        %v869 = vmul.f32 %v839, 1.442695
        %v870 = vpow.pop %v869
        %v871 = vmul.f32 %v840, 1.442695
        %v872 = vpow.pop %v871
        %vm873 = vcmp.gt.f32.partialorder %v672, 0.0
        %vm874 = vcmp.gt.f32.partialorder %v673, 0.0
        %vm875 = vcmp.gt.f32.partialorder %v674, 0.0
        %vm876 = vcmp.gt.f32.partialorder %v675, 0.0
        %vm877 = vcmp.gt.f32.partialorder %v676, 0.0
        %vm878 = vcmp.gt.f32.partialorder %v677, 0.0
        %vm879 = vcmp.gt.f32.partialorder %v678, 0.0
        %vm880 = vcmp.gt.f32.partialorder %v679, 0.0
        %vm881 = vcmp.gt.f32.partialorder %v680, 0.0
        %vm882 = vcmp.gt.f32.partialorder %v681, 0.0
        %vm883 = vcmp.gt.f32.partialorder %v682, 0.0
        %vm884 = vcmp.gt.f32.partialorder %v683, 0.0
        %vm885 = vcmp.gt.f32.partialorder %v684, 0.0
        %vm886 = vcmp.gt.f32.partialorder %v685, 0.0
        %vm887 = vcmp.gt.f32.partialorder %v686, 0.0
        %vm888 = vcmp.gt.f32.partialorder %v687, 0.0
        %v889 = vmul.f32 %v842, 0.5
        %v890 = vmul.f32 %v844, 0.5
        %v891 = vmul.f32 %v846, 0.5
        %v892 = vmul.f32 %v848, 0.5
        %v893 = vmul.f32 %v850, 0.5
        %v894 = vmul.f32 %v852, 0.5
        %v895 = vmul.f32 %v854, 0.5
        %v896 = vmul.f32 %v856, 0.5
        %v897 = vmul.f32 %v858, 0.5
        %v898 = vmul.f32 %v860, 0.5
        %v899 = vmul.f32 %v862, 0.5
        %v900 = vmul.f32 %v864, 0.5
        %v901 = vmul.f32 %v866, 0.5
        %v902 = vmul.f32 %v868, 0.5
        %v903 = vmul.f32 %v870, 0.5
        %v904 = vmul.f32 %v872, 0.5
        %v905 = vsub.f32 1.0, %v889
        %v906 = vsub.f32 1.0, %v890
        %v907 = vsub.f32 1.0, %v891
        %v908 = vsub.f32 1.0, %v892
        %v909 = vsub.f32 1.0, %v893
        %v910 = vsub.f32 1.0, %v894
        %v911 = vsub.f32 1.0, %v895
        %v912 = vsub.f32 1.0, %v896
        %v913 = vsub.f32 1.0, %v897
        %v914 = vsub.f32 1.0, %v898
        %v915 = vsub.f32 1.0, %v899
        %v916 = vsub.f32 1.0, %v900
        %v917 = vsub.f32 1.0, %v901
        %v918 = vsub.f32 1.0, %v902
        %v919 = vsub.f32 1.0, %v903
        %v920 = vsub.f32 1.0, %v904
        %v921 = vsel %vm873, %v889, %v905
        %v922 = vsel %vm874, %v890, %v906
        %v923 = vsel %vm875, %v891, %v907
        %v924 = vsel %vm876, %v892, %v908
        %v925 = vsel %vm877, %v893, %v909
        %v926 = vsel %vm878, %v894, %v910
        %v927 = vsel %vm879, %v895, %v911
        %v928 = vsel %vm880, %v896, %v912
        %v929 = vsel %vm881, %v897, %v913
        %v930 = vsel %vm882, %v898, %v914
        %v931 = vsel %vm883, %v899, %v915
        %v932 = vsel %vm884, %v900, %v916
        %v933 = vsel %vm885, %v901, %v917
        %v934 = vsel %vm886, %v902, %v918
        %v935 = vsel %vm887, %v903, %v919
        %v936 = vsel %vm888, %v904, %v920
        %v937 = vmul.f32 %v921, 10.0
        %v938 = vmul.f32 %v922, 10.0
        %v939 = vmul.f32 %v923, 10.0
        %v940 = vmul.f32 %v924, 10.0
        %v941 = vmul.f32 %v925, 10.0
        %v942 = vmul.f32 %v926, 10.0
        %v943 = vmul.f32 %v927, 10.0
        %v944 = vmul.f32 %v928, 10.0
        %v945 = vmul.f32 %v929, 10.0
        %v946 = vmul.f32 %v930, 10.0
        %v947 = vmul.f32 %v931, 10.0
        %v948 = vmul.f32 %v932, 10.0
        %v949 = vmul.f32 %v933, 10.0
        %v950 = vmul.f32 %v934, 10.0
        %v951 = vmul.f32 %v935, 10.0
        %v952 = vmul.f32 %v936, 10.0
        %vm953 = vcmask 1048064
        %954 = vrot.lane.b32.xlu0 %v656, 64
        %v955 = vpop.permute.xlu0 %954
        %v956 = vsel %vm953, %v955, %v656
        %957 = vrot.lane.b32.xlu0 %v657, 64
        %v958 = vpop.permute.xlu0 %957
        %v959 = vsel %vm953, %v958, %v657
        %960 = vrot.lane.b32.xlu0 %v658, 64
        %v961 = vpop.permute.xlu0 %960
        %v962 = vsel %vm953, %v961, %v658
        %963 = vrot.lane.b32.xlu0 %v659, 64
        %v964 = vpop.permute.xlu0 %963
        %v965 = vsel %vm953, %v964, %v659
        %966 = vrot.lane.b32.xlu0 %v660, 64
        %v967 = vpop.permute.xlu0 %966
        %v968 = vsel %vm953, %v967, %v660
        %969 = vrot.lane.b32.xlu0 %v661, 64
        %v970 = vpop.permute.xlu0 %969
        %v971 = vsel %vm953, %v970, %v661
        %972 = vrot.lane.b32.xlu0 %v662, 64
        %v973 = vpop.permute.xlu0 %972
        %v974 = vsel %vm953, %v973, %v662
        %975 = vrot.lane.b32.xlu0 %v663, 64
        %v976 = vpop.permute.xlu0 %975
        %v977 = vsel %vm953, %v976, %v663
        %978 = vrot.lane.b32.xlu0 %v664, 64
        %v979 = vpop.permute.xlu0 %978
        %v980 = vsel %vm953, %v979, %v664
        %981 = vrot.lane.b32.xlu0 %v665, 64
        %v982 = vpop.permute.xlu0 %981
        %v983 = vsel %vm953, %v982, %v665
        %984 = vrot.lane.b32.xlu0 %v666, 64
        %v985 = vpop.permute.xlu0 %984
        %v986 = vsel %vm953, %v985, %v666
        %987 = vrot.lane.b32.xlu0 %v667, 64
        %v988 = vpop.permute.xlu0 %987
        %v989 = vsel %vm953, %v988, %v667
        %990 = vrot.lane.b32.xlu0 %v668, 64
        %v991 = vpop.permute.xlu0 %990
        %v992 = vsel %vm953, %v991, %v668
        %993 = vrot.lane.b32.xlu0 %v669, 64
        %v994 = vpop.permute.xlu0 %993
        %v995 = vsel %vm953, %v994, %v669
        %996 = vrot.lane.b32.xlu0 %v670, 64
        %v997 = vpop.permute.xlu0 %996
        %v998 = vsel %vm953, %v997, %v670
        %999 = vrot.lane.b32.xlu0 %v671, 64
        %v1000 = vpop.permute.xlu0 %999
        %v1001 = vsel %vm953, %v1000, %v671
        %1002 = vrot.lane.b32.xlu0 %v956, 64
        %v1003 = vpop.permute.xlu0 %1002
        %1004 = vrot.lane.b32.xlu0 %v959, 64
        %v1005 = vpop.permute.xlu0 %1004
        %1006 = vrot.lane.b32.xlu0 %v962, 64
        %v1007 = vpop.permute.xlu0 %1006
        %1008 = vrot.lane.b32.xlu0 %v965, 64
        %v1009 = vpop.permute.xlu0 %1008
        %1010 = vrot.lane.b32.xlu0 %v968, 64
        %v1011 = vpop.permute.xlu0 %1010
        %1012 = vrot.lane.b32.xlu0 %v971, 64
        %v1013 = vpop.permute.xlu0 %1012
        %1014 = vrot.lane.b32.xlu0 %v974, 64
        %v1015 = vpop.permute.xlu0 %1014
        %1016 = vrot.lane.b32.xlu0 %v977, 64
        %v1017 = vpop.permute.xlu0 %1016
        %1018 = vrot.lane.b32.xlu0 %v980, 64
        %v1019 = vpop.permute.xlu0 %1018
        %1020 = vrot.lane.b32.xlu0 %v983, 64
        %v1021 = vpop.permute.xlu0 %1020
        %1022 = vrot.lane.b32.xlu0 %v986, 64
        %v1023 = vpop.permute.xlu0 %1022
        %1024 = vrot.lane.b32.xlu0 %v989, 64
        %v1025 = vpop.permute.xlu0 %1024
        %1026 = vrot.lane.b32.xlu0 %v992, 64
        %v1027 = vpop.permute.xlu0 %1026
        %1028 = vrot.lane.b32.xlu0 %v995, 64
        %v1029 = vpop.permute.xlu0 %1028
        %1030 = vrot.lane.b32.xlu0 %v998, 64
        %v1031 = vpop.permute.xlu0 %1030
        %1032 = vrot.lane.b32.xlu0 %v1001, 64
        %v1033 = vpop.permute.xlu0 %1032
        %v1034 = vsel %vm953, %v1003, %v656
        %v1035 = vsel %vm953, %v1005, %v657
        %v1036 = vsel %vm953, %v1007, %v658
        %v1037 = vsel %vm953, %v1009, %v659
        %v1038 = vsel %vm953, %v1011, %v660
        %v1039 = vsel %vm953, %v1013, %v661
        %v1040 = vsel %vm953, %v1015, %v662
        %v1041 = vsel %vm953, %v1017, %v663
        %v1042 = vsel %vm953, %v1019, %v664
        %v1043 = vsel %vm953, %v1021, %v665
        %v1044 = vsel %vm953, %v1023, %v666
        %v1045 = vsel %vm953, %v1025, %v667
        %v1046 = vsel %vm953, %v1027, %v668
        %v1047 = vsel %vm953, %v1029, %v669
        %v1048 = vsel %vm953, %v1031, %v670
        %v1049 = vsel %vm953, %v1033, %v671
        %1066 = vrot.lane.b32.xlu0 %v656, 1
        %v1067 = vpop.permute.xlu0 %1066
        %1068 = vrot.lane.b32.xlu0 %v657, 1
        %v1069 = vpop.permute.xlu0 %1068
        %1070 = vrot.lane.b32.xlu0 %v658, 1
        %v1071 = vpop.permute.xlu0 %1070
        %1072 = vrot.lane.b32.xlu0 %v659, 1
        %v1073 = vpop.permute.xlu0 %1072
        %1074 = vrot.lane.b32.xlu0 %v660, 1
        %v1075 = vpop.permute.xlu0 %1074
        %1076 = vrot.lane.b32.xlu0 %v661, 1
        %v1077 = vpop.permute.xlu0 %1076
        %1078 = vrot.lane.b32.xlu0 %v662, 1
        %v1079 = vpop.permute.xlu0 %1078
        %1080 = vrot.lane.b32.xlu0 %v663, 1
        %v1081 = vpop.permute.xlu0 %1080
        %1082 = vrot.lane.b32.xlu0 %v664, 1
        %v1083 = vpop.permute.xlu0 %1082
        %1084 = vrot.lane.b32.xlu0 %v665, 1
        %v1085 = vpop.permute.xlu0 %1084
        %1086 = vrot.lane.b32.xlu0 %v666, 1
        %v1087 = vpop.permute.xlu0 %1086
        %1088 = vrot.lane.b32.xlu0 %v667, 1
        %v1089 = vpop.permute.xlu0 %1088
        %1090 = vrot.lane.b32.xlu0 %v668, 1
        %v1091 = vpop.permute.xlu0 %1090
        %1092 = vrot.lane.b32.xlu0 %v669, 1
        %v1093 = vpop.permute.xlu0 %1092
        %1094 = vrot.lane.b32.xlu0 %v670, 1
        %v1095 = vpop.permute.xlu0 %1094
        %1096 = vrot.lane.b32.xlu0 %v671, 1
        %v1097 = vpop.permute.xlu0 %1096
        %v1114 = vsub.f32 %v1034, %v1067
        %v1115 = vsub.f32 %v1035, %v1069
        %v1116 = vsub.f32 %v1036, %v1071
        %v1117 = vsub.f32 %v1037, %v1073
        %v1118 = vsub.f32 %v1038, %v1075
        %v1119 = vsub.f32 %v1039, %v1077
        %v1120 = vsub.f32 %v1040, %v1079
        %v1121 = vsub.f32 %v1041, %v1081
        %v1122 = vsub.f32 %v1042, %v1083
        %v1123 = vsub.f32 %v1043, %v1085
        %v1124 = vsub.f32 %v1044, %v1087
        %v1125 = vsub.f32 %v1045, %v1089
        %v1126 = vsub.f32 %v1046, %v1091
        %v1127 = vsub.f32 %v1047, %v1093
        %v1128 = vsub.f32 %v1048, %v1095
        %v1129 = vsub.f32 %v1049, %v1097
        %v1130 = vsub.f32 1.0, %v792
        %v1132 = vlaneseq
        %v1133 = vshrl.u32 %v1132, 7
        %v1134 = vsub.s32 0, %v1133
        %v1135 = vrot.slane %v1130, %v1134
        %1136 = vrot.lane.b32.xlu0 %v1135, 1
        %v1137 = vpop.permute.xlu0 %1136
        %v1139 = vmul.f32 %v1114, %v1137
        %v1140 = vmul.f32 %v1115, %v1137
        %v1141 = vmul.f32 %v1116, %v1137
        %v1142 = vmul.f32 %v1117, %v1137
        %v1143 = vmul.f32 %v1118, %v1137
        %v1144 = vmul.f32 %v1119, %v1137
        %v1145 = vmul.f32 %v1120, %v1137
        %v1146 = vmul.f32 %v1121, %v1137
        %v1147 = vmul.f32 %v1122, %v1137
        %v1148 = vmul.f32 %v1123, %v1137
        %v1149 = vmul.f32 %v1124, %v1137
        %v1150 = vmul.f32 %v1125, %v1137
        %v1151 = vmul.f32 %v1126, %v1137
        %v1152 = vmul.f32 %v1127, %v1137
        %v1153 = vmul.f32 %v1128, %v1137
        %v1154 = vmul.f32 %v1129, %v1137
        %v1155 = vmul.f32 %v792, 1e+10
        %v1157 = vlaneseq
        %v1158 = vshrl.u32 %v1157, 7
        %v1159 = vsub.s32 0, %v1158
        %v1160 = vrot.slane %v1155, %v1159
        %1161 = vrot.lane.b32.xlu0 %v1160, 1
        %v1162 = vpop.permute.xlu0 %1161
        %v1164 = vadd.f32 %v1139, %v1162
        %v1165 = vadd.f32 %v1140, %v1162
        %v1166 = vadd.f32 %v1141, %v1162
        %v1167 = vadd.f32 %v1142, %v1162
        %v1168 = vadd.f32 %v1143, %v1162
        %v1169 = vadd.f32 %v1144, %v1162
        %v1170 = vadd.f32 %v1145, %v1162
        %v1171 = vadd.f32 %v1146, %v1162
        %v1172 = vadd.f32 %v1147, %v1162
        %v1173 = vadd.f32 %v1148, %v1162
        %v1174 = vadd.f32 %v1149, %v1162
        %v1175 = vadd.f32 %v1150, %v1162
        %v1176 = vadd.f32 %v1151, %v1162
        %v1177 = vadd.f32 %v1152, %v1162
        %v1178 = vadd.f32 %v1153, %v1162
        %v1179 = vadd.f32 %v1154, %v1162
        %1196 = vrot.lane.b32.xlu0 %v1164, 127
        %v1197 = vpop.permute.xlu0 %1196
        %1198 = vrot.lane.b32.xlu0 %v1165, 127
        %v1199 = vpop.permute.xlu0 %1198
        %1200 = vrot.lane.b32.xlu0 %v1166, 127
        %v1201 = vpop.permute.xlu0 %1200
        %1202 = vrot.lane.b32.xlu0 %v1167, 127
        %v1203 = vpop.permute.xlu0 %1202
        %1204 = vrot.lane.b32.xlu0 %v1168, 127
        %v1205 = vpop.permute.xlu0 %1204
        %1206 = vrot.lane.b32.xlu0 %v1169, 127
        %v1207 = vpop.permute.xlu0 %1206
        %1208 = vrot.lane.b32.xlu0 %v1170, 127
        %v1209 = vpop.permute.xlu0 %1208
        %1210 = vrot.lane.b32.xlu0 %v1171, 127
        %v1211 = vpop.permute.xlu0 %1210
        %1212 = vrot.lane.b32.xlu0 %v1172, 127
        %v1213 = vpop.permute.xlu0 %1212
        %1214 = vrot.lane.b32.xlu0 %v1173, 127
        %v1215 = vpop.permute.xlu0 %1214
        %1216 = vrot.lane.b32.xlu0 %v1174, 127
        %v1217 = vpop.permute.xlu0 %1216
        %1218 = vrot.lane.b32.xlu0 %v1175, 127
        %v1219 = vpop.permute.xlu0 %1218
        %1220 = vrot.lane.b32.xlu0 %v1176, 127
        %v1221 = vpop.permute.xlu0 %1220
        %1222 = vrot.lane.b32.xlu0 %v1177, 127
        %v1223 = vpop.permute.xlu0 %1222
        %1224 = vrot.lane.b32.xlu0 %v1178, 127
        %v1225 = vpop.permute.xlu0 %1224
        %1226 = vrot.lane.b32.xlu0 %v1179, 127
        %v1227 = vpop.permute.xlu0 %1226
        %v1244 = vmul.f32 %v937, %v1197
        %v1245 = vmul.f32 %v938, %v1199
        %v1246 = vmul.f32 %v939, %v1201
        %v1247 = vmul.f32 %v940, %v1203
        %v1248 = vmul.f32 %v941, %v1205
        %v1249 = vmul.f32 %v942, %v1207
        %v1250 = vmul.f32 %v943, %v1209
        %v1251 = vmul.f32 %v944, %v1211
        %v1252 = vmul.f32 %v945, %v1213
        %v1253 = vmul.f32 %v946, %v1215
        %v1254 = vmul.f32 %v947, %v1217
        %v1255 = vmul.f32 %v948, %v1219
        %v1256 = vmul.f32 %v949, %v1221
        %v1257 = vmul.f32 %v950, %v1223
        %v1258 = vmul.f32 %v951, %v1225
        %v1259 = vmul.f32 %v952, %v1227
        %vm1260 = vcmask 523264
        %v1262 = vsel %vm1260, %v1244, 0
        %v1265 = vsel %vm1260, %v1245, 0
        %v1268 = vsel %vm1260, %v1246, 0
        %v1271 = vsel %vm1260, %v1247, 0
        %v1274 = vsel %vm1260, %v1248, 0
        %v1277 = vsel %vm1260, %v1249, 0
        %v1280 = vsel %vm1260, %v1250, 0
        %v1283 = vsel %vm1260, %v1251, 0
        %v1286 = vsel %vm1260, %v1252, 0
        %v1289 = vsel %vm1260, %v1253, 0
        %v1292 = vsel %vm1260, %v1254, 0
        %v1295 = vsel %vm1260, %v1255, 0
        %v1298 = vsel %vm1260, %v1256, 0
        %v1301 = vsel %vm1260, %v1257, 0
        %v1304 = vsel %vm1260, %v1258, 0
        %v1307 = vsel %vm1260, %v1259, 0
        %1309 = vmatprep.subr.mxu0 0.0
        %1310 = vmatpush1.msra.mxu0 %v784
        %1311 = vmatprep.subr.mxu0 0.0
        %1312 = vmatpush1.msra.mxu0 %v785
        %1313 = vmatprep.subr.mxu0 0.0
        %1314 = vmatpush1.msra.mxu0 %v786
        %1315 = vmatprep.subr.mxu0 0.0
        %1316 = vmatpush1.msra.mxu0 %v787
        %1317 = vmatprep.subr.mxu0 0.0
        %1318 = vmatpush1.msra.mxu0 %v788
        %1319 = vmatprep.subr.mxu0 0.0
        %1320 = vmatpush1.msra.mxu0 %v789
        %1321 = vmatprep.subr.mxu0 0.0
        %1322 = vmatpush1.msra.mxu0 %v790
        %1323 = vmatprep.subr.mxu0 0.0
        %1324 = vmatpush1.msra.mxu0 %v791
        %1325 = vmatprep.subr.mxu0 0.0
        %1326 = vmatpush1.msra.mxu0 0.0
        %1327 = vmatprep.subr.mxu0 0.0
        %1328 = vmatpush1.msra.mxu0 0.0
        %1329 = vmatprep.subr.mxu0 0.0
        %1330 = vmatpush1.msra.mxu0 0.0
        %1331 = vmatprep.subr.mxu0 0.0
        %1332 = vmatpush1.msra.mxu0 0.0
        %1333 = vmatprep.subr.mxu0 0.0
        %1334 = vmatpush1.msra.mxu0 0.0
        %1335 = vmatprep.subr.mxu0 0.0
        %1336 = vmatpush1.msra.mxu0 0.0
        %1337 = vmatprep.subr.mxu0 0.0
        %1338 = vmatpush1.msra.mxu0 0.0
        %1339 = vmatprep.subr.mxu0 0.0
        %1340 = vmatpush1.msra.mxu0 0.0
        %1341 = vmatprep.subr.mxu0 0.0
        %1342 = vmatpush1.msra.mxu0 0.0
        %1343 = vmatprep.subr.mxu0 0.0
        %1344 = vmatpush1.msra.mxu0 0.0
        %1345 = vmatprep.subr.mxu0 0.0
        %1346 = vmatpush1.msra.mxu0 0.0
        %1347 = vmatprep.subr.mxu0 0.0
        %1348 = vmatpush1.msra.mxu0 0.0
        %1349 = vmatprep.subr.mxu0 0.0
        %1350 = vmatpush1.msra.mxu0 0.0
        %1351 = vmatprep.subr.mxu0 0.0
        %1352 = vmatpush1.msra.mxu0 0.0
        %1353 = vmatprep.subr.mxu0 0.0
        %1354 = vmatpush1.msra.mxu0 0.0
        %1355 = vmatprep.subr.mxu0 0.0
        %1356 = vmatpush1.msra.mxu0 0.0
        %1357 = vmatprep.subr.mxu0 0.0
        %1358 = vmatpush1.msra.mxu0 0.0
        %1359 = vmatprep.subr.mxu0 0.0
        %1360 = vmatpush1.msra.mxu0 0.0
        %1361 = vmatprep.subr.mxu0 0.0
        %1362 = vmatpush1.msra.mxu0 0.0
        %1363 = vmatprep.subr.mxu0 0.0
        %1364 = vmatpush1.msra.mxu0 0.0
        %1365 = vmatprep.subr.mxu0 0.0
        %1366 = vmatpush1.msra.mxu0 0.0
        %1367 = vmatprep.subr.mxu0 0.0
        %1368 = vmatpush1.msra.mxu0 0.0
        %1369 = vmatprep.subr.mxu0 0.0
        %1370 = vmatpush1.msra.mxu0 0.0
        %1371 = vmatprep.subr.mxu0 0.0
        %1372 = vmatpush1.msra.mxu0 0.0
        %1373 = vmatprep.mubr.f32.mxu0 0.0
        %1374 = vmatmul.mubr.f32.gmra.mrb[0].mxu0 %v1262
        %v1375 = vpop.f32.mrb[0].mxu0
        %v1376 = vadd.f32 0.0, %v1375
        %v1377 = vpop.f32.mrb[0].mxu0
        %1378 = vmatprep.mubr.f32.mxu0 0.0
        %1379 = vmatmul.mubr.f32.gmra.mrb[0].mxu0 %v1265
        %v1380 = vpop.f32.mrb[0].mxu0
        %v1381 = vadd.f32 0.0, %v1380
        %v1382 = vpop.f32.mrb[0].mxu0
        %1383 = vmatprep.mubr.f32.mxu0 0.0
        %1384 = vmatmul.mubr.f32.gmra.mrb[0].mxu0 %v1268
        %v1385 = vpop.f32.mrb[0].mxu0
        %v1386 = vadd.f32 0.0, %v1385
        %v1387 = vpop.f32.mrb[0].mxu0
        %1388 = vmatprep.mubr.f32.mxu0 0.0
        %1389 = vmatmul.mubr.f32.gmra.mrb[0].mxu0 %v1271
        %v1390 = vpop.f32.mrb[0].mxu0
        %v1391 = vadd.f32 0.0, %v1390
        %v1392 = vpop.f32.mrb[0].mxu0
        %1393 = vmatprep.mubr.f32.mxu0 0.0
        %1394 = vmatmul.mubr.f32.gmra.mrb[0].mxu0 %v1274
        %v1395 = vpop.f32.mrb[0].mxu0
        %v1396 = vadd.f32 0.0, %v1395
        %v1397 = vpop.f32.mrb[0].mxu0
        %1398 = vmatprep.mubr.f32.mxu0 0.0
        %1399 = vmatmul.mubr.f32.gmra.mrb[0].mxu0 %v1277
        %v1400 = vpop.f32.mrb[0].mxu0
        %v1401 = vadd.f32 0.0, %v1400
        %v1402 = vpop.f32.mrb[0].mxu0
        %1403 = vmatprep.mubr.f32.mxu0 0.0
        %1404 = vmatmul.mubr.f32.gmra.mrb[0].mxu0 %v1280
        %v1405 = vpop.f32.mrb[0].mxu0
        %v1406 = vadd.f32 0.0, %v1405
        %v1407 = vpop.f32.mrb[0].mxu0
        %1408 = vmatprep.mubr.f32.mxu0 0.0
        %1409 = vmatmul.mubr.f32.gmra.mrb[0].mxu0 %v1283
        %v1410 = vpop.f32.mrb[0].mxu0
        %v1411 = vadd.f32 0.0, %v1410
        %v1412 = vpop.f32.mrb[0].mxu0
        %1413 = vmatprep.mubr.f32.mxu0 0.0
        %1414 = vmatmul.mubr.f32.gmra.mrb[0].mxu0 %v1286
        %v1415 = vpop.f32.mrb[0].mxu0
        %v1416 = vadd.f32 0.0, %v1415
        %v1417 = vpop.f32.mrb[0].mxu0
        %1418 = vmatprep.mubr.f32.mxu0 0.0
        %1419 = vmatmul.mubr.f32.gmra.mrb[0].mxu0 %v1289
        %v1420 = vpop.f32.mrb[0].mxu0
        %v1421 = vadd.f32 0.0, %v1420
        %v1422 = vpop.f32.mrb[0].mxu0
        %1423 = vmatprep.mubr.f32.mxu0 0.0
        %1424 = vmatmul.mubr.f32.gmra.mrb[0].mxu0 %v1292
        %v1425 = vpop.f32.mrb[0].mxu0
        %v1426 = vadd.f32 0.0, %v1425
        %v1427 = vpop.f32.mrb[0].mxu0
        %1428 = vmatprep.mubr.f32.mxu0 0.0
        %1429 = vmatmul.mubr.f32.gmra.mrb[0].mxu0 %v1295
        %v1430 = vpop.f32.mrb[0].mxu0
        %v1431 = vadd.f32 0.0, %v1430
        %v1432 = vpop.f32.mrb[0].mxu0
        %1433 = vmatprep.mubr.f32.mxu0 0.0
        %1434 = vmatmul.mubr.f32.gmra.mrb[0].mxu0 %v1298
        %v1435 = vpop.f32.mrb[0].mxu0
        %v1436 = vadd.f32 0.0, %v1435
        %v1437 = vpop.f32.mrb[0].mxu0
        %1438 = vmatprep.mubr.f32.mxu0 0.0
        %1439 = vmatmul.mubr.f32.gmra.mrb[0].mxu0 %v1301
        %v1440 = vpop.f32.mrb[0].mxu0
        %v1441 = vadd.f32 0.0, %v1440
        %v1442 = vpop.f32.mrb[0].mxu0
        %1443 = vmatprep.mubr.f32.mxu0 0.0
        %1444 = vmatmul.mubr.f32.gmra.mrb[0].mxu0 %v1304
        %v1445 = vpop.f32.mrb[0].mxu0
        %v1446 = vadd.f32 0.0, %v1445
        %v1447 = vpop.f32.mrb[0].mxu0
        %1448 = vmatprep.mubr.f32.mxu0 0.0
        %1449 = vmatmul.mubr.f32.gmra.mrb[0].mxu0 %v1307
        %v1450 = vpop.f32.mrb[0].mxu0
        %v1451 = vadd.f32 0.0, %v1450
        %v1452 = vpop.f32.mrb[0].mxu0
        %1453 = vdwg.mxu0
        %v1454 = vsub.f32 0.0, %v1244
        %v1455 = vsub.f32 0.0, %v1245
        %v1456 = vsub.f32 0.0, %v1246
        %v1457 = vsub.f32 0.0, %v1247
        %v1458 = vsub.f32 0.0, %v1248
        %v1459 = vsub.f32 0.0, %v1249
        %v1460 = vsub.f32 0.0, %v1250
        %v1461 = vsub.f32 0.0, %v1251
        %v1462 = vsub.f32 0.0, %v1252
        %v1463 = vsub.f32 0.0, %v1253
        %v1464 = vsub.f32 0.0, %v1254
        %v1465 = vsub.f32 0.0, %v1255
        %v1466 = vsub.f32 0.0, %v1256
        %v1467 = vsub.f32 0.0, %v1257
        %v1468 = vsub.f32 0.0, %v1258
        %v1469 = vsub.f32 0.0, %v1259
        %v1470 = vmul.f32 %v1454, 1.442695
        %v1471 = vpow.pop %v1470
        %v1472 = vmul.f32 %v1455, 1.442695
        %v1473 = vpow.pop %v1472
        %v1474 = vmul.f32 %v1456, 1.442695
        %v1475 = vpow.pop %v1474
        %v1476 = vmul.f32 %v1457, 1.442695
        %v1477 = vpow.pop %v1476
        %v1478 = vmul.f32 %v1458, 1.442695
        %v1479 = vpow.pop %v1478
        %v1480 = vmul.f32 %v1459, 1.442695
        %v1481 = vpow.pop %v1480
        %v1482 = vmul.f32 %v1460, 1.442695
        %v1483 = vpow.pop %v1482
        %v1484 = vmul.f32 %v1461, 1.442695
        %v1485 = vpow.pop %v1484
        %v1486 = vmul.f32 %v1462, 1.442695
        %v1487 = vpow.pop %v1486
        %v1488 = vmul.f32 %v1463, 1.442695
        %v1489 = vpow.pop %v1488
        %v1490 = vmul.f32 %v1464, 1.442695
        %v1491 = vpow.pop %v1490
        %v1492 = vmul.f32 %v1465, 1.442695
        %v1493 = vpow.pop %v1492
        %v1494 = vmul.f32 %v1466, 1.442695
        %v1495 = vpow.pop %v1494
        %v1496 = vmul.f32 %v1467, 1.442695
        %v1497 = vpow.pop %v1496
        %v1498 = vmul.f32 %v1468, 1.442695
        %v1499 = vpow.pop %v1498
        %v1500 = vmul.f32 %v1469, 1.442695
        %v1501 = vpow.pop %v1500
        %v1502 = vsub.f32 0.0, %v1376
        %v1503 = vsub.f32 0.0, %v1381
        %v1504 = vsub.f32 0.0, %v1386
        %v1505 = vsub.f32 0.0, %v1391
        %v1506 = vsub.f32 0.0, %v1396
        %v1507 = vsub.f32 0.0, %v1401
        %v1508 = vsub.f32 0.0, %v1406
        %v1509 = vsub.f32 0.0, %v1411
        %v1510 = vsub.f32 0.0, %v1416
        %v1511 = vsub.f32 0.0, %v1421
        %v1512 = vsub.f32 0.0, %v1426
        %v1513 = vsub.f32 0.0, %v1431
        %v1514 = vsub.f32 0.0, %v1436
        %v1515 = vsub.f32 0.0, %v1441
        %v1516 = vsub.f32 0.0, %v1446
        %v1517 = vsub.f32 0.0, %v1451
        %v1518 = vmul.f32 %v1502, 1.442695
        %v1519 = vpow.pop %v1518
        %v1520 = vmul.f32 %v1503, 1.442695
        %v1521 = vpow.pop %v1520
        %v1522 = vmul.f32 %v1504, 1.442695
        %v1523 = vpow.pop %v1522
        %v1524 = vmul.f32 %v1505, 1.442695
        %v1525 = vpow.pop %v1524
        %v1526 = vmul.f32 %v1506, 1.442695
        %v1527 = vpow.pop %v1526
        %v1528 = vmul.f32 %v1507, 1.442695
        %v1529 = vpow.pop %v1528
        %v1530 = vmul.f32 %v1508, 1.442695
        %v1531 = vpow.pop %v1530
        %v1532 = vmul.f32 %v1509, 1.442695
        %v1533 = vpow.pop %v1532
        %v1534 = vmul.f32 %v1510, 1.442695
        %v1535 = vpow.pop %v1534
        %v1536 = vmul.f32 %v1511, 1.442695
        %v1537 = vpow.pop %v1536
        %v1538 = vmul.f32 %v1512, 1.442695
        %v1539 = vpow.pop %v1538
        %v1540 = vmul.f32 %v1513, 1.442695
        %v1541 = vpow.pop %v1540
        %v1542 = vmul.f32 %v1514, 1.442695
        %v1543 = vpow.pop %v1542
        %v1544 = vmul.f32 %v1515, 1.442695
        %v1545 = vpow.pop %v1544
        %v1546 = vmul.f32 %v1516, 1.442695
        %v1547 = vpow.pop %v1546
        %v1548 = vmul.f32 %v1517, 1.442695
        %v1549 = vpow.pop %v1548
        %v1550 = vsub.f32 1.0, %v1471
        %v1551 = vsub.f32 1.0, %v1473
        %v1552 = vsub.f32 1.0, %v1475
        %v1553 = vsub.f32 1.0, %v1477
        %v1554 = vsub.f32 1.0, %v1479
        %v1555 = vsub.f32 1.0, %v1481
        %v1556 = vsub.f32 1.0, %v1483
        %v1557 = vsub.f32 1.0, %v1485
        %v1558 = vsub.f32 1.0, %v1487
        %v1559 = vsub.f32 1.0, %v1489
        %v1560 = vsub.f32 1.0, %v1491
        %v1561 = vsub.f32 1.0, %v1493
        %v1562 = vsub.f32 1.0, %v1495
        %v1563 = vsub.f32 1.0, %v1497
        %v1564 = vsub.f32 1.0, %v1499
        %v1565 = vsub.f32 1.0, %v1501
        %v1566 = vmul.f32 %v1519, %v1550
        %v1567 = vmul.f32 %v1521, %v1551
        %v1568 = vmul.f32 %v1523, %v1552
        %v1569 = vmul.f32 %v1525, %v1553
        %v1570 = vmul.f32 %v1527, %v1554
        %v1571 = vmul.f32 %v1529, %v1555
        %v1572 = vmul.f32 %v1531, %v1556
        %v1573 = vmul.f32 %v1533, %v1557
        %v1574 = vmul.f32 %v1535, %v1558
        %v1575 = vmul.f32 %v1537, %v1559
        %v1576 = vmul.f32 %v1539, %v1560
        %v1577 = vmul.f32 %v1541, %v1561
        %v1578 = vmul.f32 %v1543, %v1562
        %v1579 = vmul.f32 %v1545, %v1563
        %v1580 = vmul.f32 %v1547, %v1564
        %v1581 = vmul.f32 %v1549, %v1565
        %v1582 = vmul.f32 %v1566, %v736
        %v1583 = vmul.f32 %v1567, %v737
        %v1584 = vmul.f32 %v1568, %v738
        %v1585 = vmul.f32 %v1569, %v739
        %v1586 = vmul.f32 %v1570, %v740
        %v1587 = vmul.f32 %v1571, %v741
        %v1588 = vmul.f32 %v1572, %v742
        %v1589 = vmul.f32 %v1573, %v743
        %v1590 = vmul.f32 %v1574, %v744
        %v1591 = vmul.f32 %v1575, %v745
        %v1592 = vmul.f32 %v1576, %v746
        %v1593 = vmul.f32 %v1577, %v747
        %v1594 = vmul.f32 %v1578, %v748
        %v1595 = vmul.f32 %v1579, %v749
        %v1596 = vmul.f32 %v1580, %v750
        %v1597 = vmul.f32 %v1581, %v751
        %v1598 = vmul.f32 %v1566, %v752
        %v1599 = vmul.f32 %v1567, %v753
        %v1600 = vmul.f32 %v1568, %v754
        %v1601 = vmul.f32 %v1569, %v755
        %v1602 = vmul.f32 %v1570, %v756
        %v1603 = vmul.f32 %v1571, %v757
        %v1604 = vmul.f32 %v1572, %v758
        %v1605 = vmul.f32 %v1573, %v759
        %v1606 = vmul.f32 %v1574, %v760
        %v1607 = vmul.f32 %v1575, %v761
        %v1608 = vmul.f32 %v1576, %v762
        %v1609 = vmul.f32 %v1577, %v763
        %v1610 = vmul.f32 %v1578, %v764
        %v1611 = vmul.f32 %v1579, %v765
        %v1612 = vmul.f32 %v1580, %v766
        %v1613 = vmul.f32 %v1581, %v767
        %v1614 = vmul.f32 %v1566, %v768
        %v1615 = vmul.f32 %v1567, %v769
        %v1616 = vmul.f32 %v1568, %v770
        %v1617 = vmul.f32 %v1569, %v771
        %v1618 = vmul.f32 %v1570, %v772
        %v1619 = vmul.f32 %v1571, %v773
        %v1620 = vmul.f32 %v1572, %v774
        %v1621 = vmul.f32 %v1573, %v775
        %v1622 = vmul.f32 %v1574, %v776
        %v1623 = vmul.f32 %v1575, %v777
        %v1624 = vmul.f32 %v1576, %v778
        %v1625 = vmul.f32 %v1577, %v779
        %v1626 = vmul.f32 %v1578, %v780
        %v1627 = vmul.f32 %v1579, %v781
        %v1628 = vmul.f32 %v1580, %v782
        %v1629 = vmul.f32 %v1581, %v783
        %v1630 = vsel %vm1260, %v1582, 0.0
        %1631 = vadd.xlane.f32.xlu0 %v1630
        %v1632 = vpop.xlane.xlu0 %1631
        %v1633 = vsel %vm1260, %v1583, 0.0
        %1634 = vadd.xlane.f32.xlu0 %v1633
        %v1635 = vpop.xlane.xlu0 %1634
        %v1636 = vsel %vm1260, %v1584, 0.0
        %1637 = vadd.xlane.f32.xlu0 %v1636
        %v1638 = vpop.xlane.xlu0 %1637
        %v1639 = vsel %vm1260, %v1585, 0.0
        %1640 = vadd.xlane.f32.xlu0 %v1639
        %v1641 = vpop.xlane.xlu0 %1640
        %v1642 = vsel %vm1260, %v1586, 0.0
        %1643 = vadd.xlane.f32.xlu0 %v1642
        %v1644 = vpop.xlane.xlu0 %1643
        %v1645 = vsel %vm1260, %v1587, 0.0
        %1646 = vadd.xlane.f32.xlu0 %v1645
        %v1647 = vpop.xlane.xlu0 %1646
        %v1648 = vsel %vm1260, %v1588, 0.0
        %1649 = vadd.xlane.f32.xlu0 %v1648
        %v1650 = vpop.xlane.xlu0 %1649
        %v1651 = vsel %vm1260, %v1589, 0.0
        %1652 = vadd.xlane.f32.xlu0 %v1651
        %v1653 = vpop.xlane.xlu0 %1652
        %v1654 = vsel %vm1260, %v1590, 0.0
        %1655 = vadd.xlane.f32.xlu0 %v1654
        %v1656 = vpop.xlane.xlu0 %1655
        %v1657 = vsel %vm1260, %v1591, 0.0
        %1658 = vadd.xlane.f32.xlu0 %v1657
        %v1659 = vpop.xlane.xlu0 %1658
        %v1660 = vsel %vm1260, %v1592, 0.0
        %1661 = vadd.xlane.f32.xlu0 %v1660
        %v1662 = vpop.xlane.xlu0 %1661
        %v1663 = vsel %vm1260, %v1593, 0.0
        %1664 = vadd.xlane.f32.xlu0 %v1663
        %v1665 = vpop.xlane.xlu0 %1664
        %v1666 = vsel %vm1260, %v1594, 0.0
        %1667 = vadd.xlane.f32.xlu0 %v1666
        %v1668 = vpop.xlane.xlu0 %1667
        %v1669 = vsel %vm1260, %v1595, 0.0
        %1670 = vadd.xlane.f32.xlu0 %v1669
        %v1671 = vpop.xlane.xlu0 %1670
        %v1672 = vsel %vm1260, %v1596, 0.0
        %1673 = vadd.xlane.f32.xlu0 %v1672
        %v1674 = vpop.xlane.xlu0 %1673
        %v1675 = vsel %vm1260, %v1597, 0.0
        %1676 = vadd.xlane.f32.xlu0 %v1675
        %v1677 = vpop.xlane.xlu0 %1676
        %v1678 = vsel %vm1260, %v1598, 0.0
        %1679 = vadd.xlane.f32.xlu0 %v1678
        %v1680 = vpop.xlane.xlu0 %1679
        %v1681 = vsel %vm1260, %v1599, 0.0
        %1682 = vadd.xlane.f32.xlu0 %v1681
        %v1683 = vpop.xlane.xlu0 %1682
        %v1684 = vsel %vm1260, %v1600, 0.0
        %1685 = vadd.xlane.f32.xlu0 %v1684
        %v1686 = vpop.xlane.xlu0 %1685
        %v1687 = vsel %vm1260, %v1601, 0.0
        %1688 = vadd.xlane.f32.xlu0 %v1687
        %v1689 = vpop.xlane.xlu0 %1688
        %v1690 = vsel %vm1260, %v1602, 0.0
        %1691 = vadd.xlane.f32.xlu0 %v1690
        %v1692 = vpop.xlane.xlu0 %1691
        %v1693 = vsel %vm1260, %v1603, 0.0
        %1694 = vadd.xlane.f32.xlu0 %v1693
        %v1695 = vpop.xlane.xlu0 %1694
        %v1696 = vsel %vm1260, %v1604, 0.0
        %1697 = vadd.xlane.f32.xlu0 %v1696
        %v1698 = vpop.xlane.xlu0 %1697
        %v1699 = vsel %vm1260, %v1605, 0.0
        %1700 = vadd.xlane.f32.xlu0 %v1699
        %v1701 = vpop.xlane.xlu0 %1700
        %v1702 = vsel %vm1260, %v1606, 0.0
        %1703 = vadd.xlane.f32.xlu0 %v1702
        %v1704 = vpop.xlane.xlu0 %1703
        %v1705 = vsel %vm1260, %v1607, 0.0
        %1706 = vadd.xlane.f32.xlu0 %v1705
        %v1707 = vpop.xlane.xlu0 %1706
        %v1708 = vsel %vm1260, %v1608, 0.0
        %1709 = vadd.xlane.f32.xlu0 %v1708
        %v1710 = vpop.xlane.xlu0 %1709
        %v1711 = vsel %vm1260, %v1609, 0.0
        %1712 = vadd.xlane.f32.xlu0 %v1711
        %v1713 = vpop.xlane.xlu0 %1712
        %v1714 = vsel %vm1260, %v1610, 0.0
        %1715 = vadd.xlane.f32.xlu0 %v1714
        %v1716 = vpop.xlane.xlu0 %1715
        %v1717 = vsel %vm1260, %v1611, 0.0
        %1718 = vadd.xlane.f32.xlu0 %v1717
        %v1719 = vpop.xlane.xlu0 %1718
        %v1720 = vsel %vm1260, %v1612, 0.0
        %1721 = vadd.xlane.f32.xlu0 %v1720
        %v1722 = vpop.xlane.xlu0 %1721
        %v1723 = vsel %vm1260, %v1613, 0.0
        %1724 = vadd.xlane.f32.xlu0 %v1723
        %v1725 = vpop.xlane.xlu0 %1724
        %v1726 = vsel %vm1260, %v1614, 0.0
        %1727 = vadd.xlane.f32.xlu0 %v1726
        %v1728 = vpop.xlane.xlu0 %1727
        %v1729 = vsel %vm1260, %v1615, 0.0
        %1730 = vadd.xlane.f32.xlu0 %v1729
        %v1731 = vpop.xlane.xlu0 %1730
        %v1732 = vsel %vm1260, %v1616, 0.0
        %1733 = vadd.xlane.f32.xlu0 %v1732
        %v1734 = vpop.xlane.xlu0 %1733
        %v1735 = vsel %vm1260, %v1617, 0.0
        %1736 = vadd.xlane.f32.xlu0 %v1735
        %v1737 = vpop.xlane.xlu0 %1736
        %v1738 = vsel %vm1260, %v1618, 0.0
        %1739 = vadd.xlane.f32.xlu0 %v1738
        %v1740 = vpop.xlane.xlu0 %1739
        %v1741 = vsel %vm1260, %v1619, 0.0
        %1742 = vadd.xlane.f32.xlu0 %v1741
        %v1743 = vpop.xlane.xlu0 %1742
        %v1744 = vsel %vm1260, %v1620, 0.0
        %1745 = vadd.xlane.f32.xlu0 %v1744
        %v1746 = vpop.xlane.xlu0 %1745
        %v1747 = vsel %vm1260, %v1621, 0.0
        %1748 = vadd.xlane.f32.xlu0 %v1747
        %v1749 = vpop.xlane.xlu0 %1748
        %v1750 = vsel %vm1260, %v1622, 0.0
        %1751 = vadd.xlane.f32.xlu0 %v1750
        %v1752 = vpop.xlane.xlu0 %1751
        %v1753 = vsel %vm1260, %v1623, 0.0
        %1754 = vadd.xlane.f32.xlu0 %v1753
        %v1755 = vpop.xlane.xlu0 %1754
        %v1756 = vsel %vm1260, %v1624, 0.0
        %1757 = vadd.xlane.f32.xlu0 %v1756
        %v1758 = vpop.xlane.xlu0 %1757
        %v1759 = vsel %vm1260, %v1625, 0.0
        %1760 = vadd.xlane.f32.xlu0 %v1759
        %v1761 = vpop.xlane.xlu0 %1760
        %v1762 = vsel %vm1260, %v1626, 0.0
        %1763 = vadd.xlane.f32.xlu0 %v1762
        %v1764 = vpop.xlane.xlu0 %1763
        %v1765 = vsel %vm1260, %v1627, 0.0
        %1766 = vadd.xlane.f32.xlu0 %v1765
        %v1767 = vpop.xlane.xlu0 %1766
        %v1768 = vsel %vm1260, %v1628, 0.0
        %1769 = vadd.xlane.f32.xlu0 %v1768
        %v1770 = vpop.xlane.xlu0 %1769
        %v1771 = vsel %vm1260, %v1629, 0.0
        %1772 = vadd.xlane.f32.xlu0 %v1771
        %v1773 = vpop.xlane.xlu0 %1772
        %v1822 = vlaneseq
        %v1823 = vand.u32 %v1822, 127
        %v1824 = vlaneseq
        %v1825 = vshrl.u32 %v1824, 7
        %v1826 = vsub.s32 %v1823, %v1825
        %v1827 = vrot.slane %v1632, %v1826
        %v1828 = vadd.s32 %v1823, 4294967288
        %v1829 = vlaneseq
        %v1830 = vshrl.u32 %v1829, 7
        %v1831 = vsub.s32 %v1828, %v1830
        %v1832 = vrot.slane %v1635, %v1831
        %vm1833 = vcmask 130112
        %v1834 = vsel %vm1833, %v1832, %v1827
        %v1835 = vadd.s32 %v1823, 4294967280
        %v1836 = vlaneseq
        %v1837 = vshrl.u32 %v1836, 7
        %v1838 = vsub.s32 %v1835, %v1837
        %v1839 = vrot.slane %v1638, %v1838
        %vm1840 = vcmask 195712
        %v1841 = vsel %vm1840, %v1839, %v1834
        %v1842 = vadd.s32 %v1823, 4294967272
        %v1843 = vlaneseq
        %v1844 = vshrl.u32 %v1843, 7
        %v1845 = vsub.s32 %v1842, %v1844
        %v1846 = vrot.slane %v1641, %v1845
        %vm1847 = vcmask 261312
        %v1848 = vsel %vm1847, %v1846, %v1841
        %v1849 = vadd.s32 %v1823, 4294967264
        %v1850 = vlaneseq
        %v1851 = vshrl.u32 %v1850, 7
        %v1852 = vsub.s32 %v1849, %v1851
        %v1853 = vrot.slane %v1644, %v1852
        %vm1854 = vcmask 326912
        %v1855 = vsel %vm1854, %v1853, %v1848
        %v1856 = vadd.s32 %v1823, 4294967256
        %v1857 = vlaneseq
        %v1858 = vshrl.u32 %v1857, 7
        %v1859 = vsub.s32 %v1856, %v1858
        %v1860 = vrot.slane %v1647, %v1859
        %vm1861 = vcmask 392512
        %v1862 = vsel %vm1861, %v1860, %v1855
        %v1863 = vadd.s32 %v1823, 4294967248
        %v1864 = vlaneseq
        %v1865 = vshrl.u32 %v1864, 7
        %v1866 = vsub.s32 %v1863, %v1865
        %v1867 = vrot.slane %v1650, %v1866
        %vm1868 = vcmask 458112
        %v1869 = vsel %vm1868, %v1867, %v1862
        %v1870 = vadd.s32 %v1823, 4294967240
        %v1871 = vlaneseq
        %v1872 = vshrl.u32 %v1871, 7
        %v1873 = vsub.s32 %v1870, %v1872
        %v1874 = vrot.slane %v1653, %v1873
        %vm1875 = vcmask 523712
        %v1876 = vsel %vm1875, %v1874, %v1869
        %v1877 = vadd.s32 %v1823, 4294967232
        %v1878 = vlaneseq
        %v1879 = vshrl.u32 %v1878, 7
        %v1880 = vsub.s32 %v1877, %v1879
        %v1881 = vrot.slane %v1656, %v1880
        %vm1882 = vcmask 589312
        %v1883 = vsel %vm1882, %v1881, %v1876
        %v1884 = vadd.s32 %v1823, 4294967224
        %v1885 = vlaneseq
        %v1886 = vshrl.u32 %v1885, 7
        %v1887 = vsub.s32 %v1884, %v1886
        %v1888 = vrot.slane %v1659, %v1887
        %vm1889 = vcmask 654912
        %v1890 = vsel %vm1889, %v1888, %v1883
        %v1891 = vadd.s32 %v1823, 4294967216
        %v1892 = vlaneseq
        %v1893 = vshrl.u32 %v1892, 7
        %v1894 = vsub.s32 %v1891, %v1893
        %v1895 = vrot.slane %v1662, %v1894
        %vm1896 = vcmask 720512
        %v1897 = vsel %vm1896, %v1895, %v1890
        %v1898 = vadd.s32 %v1823, 4294967208
        %v1899 = vlaneseq
        %v1900 = vshrl.u32 %v1899, 7
        %v1901 = vsub.s32 %v1898, %v1900
        %v1902 = vrot.slane %v1665, %v1901
        %vm1903 = vcmask 786112
        %v1904 = vsel %vm1903, %v1902, %v1897
        %v1905 = vadd.s32 %v1823, 4294967200
        %v1906 = vlaneseq
        %v1907 = vshrl.u32 %v1906, 7
        %v1908 = vsub.s32 %v1905, %v1907
        %v1909 = vrot.slane %v1668, %v1908
        %vm1910 = vcmask 851712
        %v1911 = vsel %vm1910, %v1909, %v1904
        %v1912 = vadd.s32 %v1823, 4294967192
        %v1913 = vlaneseq
        %v1914 = vshrl.u32 %v1913, 7
        %v1915 = vsub.s32 %v1912, %v1914
        %v1916 = vrot.slane %v1671, %v1915
        %vm1917 = vcmask 917312
        %v1918 = vsel %vm1917, %v1916, %v1911
        %v1919 = vadd.s32 %v1823, 4294967184
        %v1920 = vlaneseq
        %v1921 = vshrl.u32 %v1920, 7
        %v1922 = vsub.s32 %v1919, %v1921
        %v1923 = vrot.slane %v1674, %v1922
        %vm1924 = vcmask 982912
        %v1925 = vsel %vm1924, %v1923, %v1918
        %v1926 = vadd.s32 %v1823, 4294967176
        %v1927 = vlaneseq
        %v1928 = vshrl.u32 %v1927, 7
        %v1929 = vsub.s32 %v1926, %v1928
        %v1930 = vrot.slane %v1677, %v1929
        %vm1931 = vcmask 1048512
        %v1932 = vsel %vm1931, %v1930, %v1925
        %v1933 = vlaneseq
        %v1934 = vshrl.u32 %v1933, 7
        %v1935 = vsub.s32 %v1823, %v1934
        %v1936 = vrot.slane %v1680, %v1935
        %v1937 = vlaneseq
        %v1938 = vshrl.u32 %v1937, 7
        %v1939 = vsub.s32 %v1828, %v1938
        %v1940 = vrot.slane %v1683, %v1939
        %v1941 = vsel %vm1833, %v1940, %v1936
        %v1942 = vlaneseq
        %v1943 = vshrl.u32 %v1942, 7
        %v1944 = vsub.s32 %v1835, %v1943
        %v1945 = vrot.slane %v1686, %v1944
        %v1946 = vsel %vm1840, %v1945, %v1941
        %v1947 = vlaneseq
        %v1948 = vshrl.u32 %v1947, 7
        %v1949 = vsub.s32 %v1842, %v1948
        %v1950 = vrot.slane %v1689, %v1949
        %v1951 = vsel %vm1847, %v1950, %v1946
        %v1952 = vlaneseq
        %v1953 = vshrl.u32 %v1952, 7
        %v1954 = vsub.s32 %v1849, %v1953
        %v1955 = vrot.slane %v1692, %v1954
        %v1956 = vsel %vm1854, %v1955, %v1951
        %v1957 = vlaneseq
        %v1958 = vshrl.u32 %v1957, 7
        %v1959 = vsub.s32 %v1856, %v1958
        %v1960 = vrot.slane %v1695, %v1959
        %v1961 = vsel %vm1861, %v1960, %v1956
        %v1962 = vlaneseq
        %v1963 = vshrl.u32 %v1962, 7
        %v1964 = vsub.s32 %v1863, %v1963
        %v1965 = vrot.slane %v1698, %v1964
        %v1966 = vsel %vm1868, %v1965, %v1961
        %v1967 = vlaneseq
        %v1968 = vshrl.u32 %v1967, 7
        %v1969 = vsub.s32 %v1870, %v1968
        %v1970 = vrot.slane %v1701, %v1969
        %v1971 = vsel %vm1875, %v1970, %v1966
        %v1972 = vlaneseq
        %v1973 = vshrl.u32 %v1972, 7
        %v1974 = vsub.s32 %v1877, %v1973
        %v1975 = vrot.slane %v1704, %v1974
        %v1976 = vsel %vm1882, %v1975, %v1971
        %v1977 = vlaneseq
        %v1978 = vshrl.u32 %v1977, 7
        %v1979 = vsub.s32 %v1884, %v1978
        %v1980 = vrot.slane %v1707, %v1979
        %v1981 = vsel %vm1889, %v1980, %v1976
        %v1982 = vlaneseq
        %v1983 = vshrl.u32 %v1982, 7
        %v1984 = vsub.s32 %v1891, %v1983
        %v1985 = vrot.slane %v1710, %v1984
        %v1986 = vsel %vm1896, %v1985, %v1981
        %v1987 = vlaneseq
        %v1988 = vshrl.u32 %v1987, 7
        %v1989 = vsub.s32 %v1898, %v1988
        %v1990 = vrot.slane %v1713, %v1989
        %v1991 = vsel %vm1903, %v1990, %v1986
        %v1992 = vlaneseq
        %v1993 = vshrl.u32 %v1992, 7
        %v1994 = vsub.s32 %v1905, %v1993
        %v1995 = vrot.slane %v1716, %v1994
        %v1996 = vsel %vm1910, %v1995, %v1991
        %v1997 = vlaneseq
        %v1998 = vshrl.u32 %v1997, 7
        %v1999 = vsub.s32 %v1912, %v1998
        %v2000 = vrot.slane %v1719, %v1999
        %v2001 = vsel %vm1917, %v2000, %v1996
        %v2002 = vlaneseq
        %v2003 = vshrl.u32 %v2002, 7
        %v2004 = vsub.s32 %v1919, %v2003
        %v2005 = vrot.slane %v1722, %v2004
        %v2006 = vsel %vm1924, %v2005, %v2001
        %v2007 = vlaneseq
        %v2008 = vshrl.u32 %v2007, 7
        %v2009 = vsub.s32 %v1926, %v2008
        %v2010 = vrot.slane %v1725, %v2009
        %v2011 = vsel %vm1931, %v2010, %v2006
        %v2012 = vlaneseq
        %v2013 = vshrl.u32 %v2012, 7
        %v2014 = vsub.s32 %v1823, %v2013
        %v2015 = vrot.slane %v1728, %v2014
        %v2016 = vlaneseq
        %v2017 = vshrl.u32 %v2016, 7
        %v2018 = vsub.s32 %v1828, %v2017
        %v2019 = vrot.slane %v1731, %v2018
        %v2020 = vsel %vm1833, %v2019, %v2015
        %v2021 = vlaneseq
        %v2022 = vshrl.u32 %v2021, 7
        %v2023 = vsub.s32 %v1835, %v2022
        %v2024 = vrot.slane %v1734, %v2023
        %v2025 = vsel %vm1840, %v2024, %v2020
        %v2026 = vlaneseq
        %v2027 = vshrl.u32 %v2026, 7
        %v2028 = vsub.s32 %v1842, %v2027
        %v2029 = vrot.slane %v1737, %v2028
        %v2030 = vsel %vm1847, %v2029, %v2025
        %v2031 = vlaneseq
        %v2032 = vshrl.u32 %v2031, 7
        %v2033 = vsub.s32 %v1849, %v2032
        %v2034 = vrot.slane %v1740, %v2033
        %v2035 = vsel %vm1854, %v2034, %v2030
        %v2036 = vlaneseq
        %v2037 = vshrl.u32 %v2036, 7
        %v2038 = vsub.s32 %v1856, %v2037
        %v2039 = vrot.slane %v1743, %v2038
        %v2040 = vsel %vm1861, %v2039, %v2035
        %v2041 = vlaneseq
        %v2042 = vshrl.u32 %v2041, 7
        %v2043 = vsub.s32 %v1863, %v2042
        %v2044 = vrot.slane %v1746, %v2043
        %v2045 = vsel %vm1868, %v2044, %v2040
        %v2046 = vlaneseq
        %v2047 = vshrl.u32 %v2046, 7
        %v2048 = vsub.s32 %v1870, %v2047
        %v2049 = vrot.slane %v1749, %v2048
        %v2050 = vsel %vm1875, %v2049, %v2045
        %v2051 = vlaneseq
        %v2052 = vshrl.u32 %v2051, 7
        %v2053 = vsub.s32 %v1877, %v2052
        %v2054 = vrot.slane %v1752, %v2053
        %v2055 = vsel %vm1882, %v2054, %v2050
        %v2056 = vlaneseq
        %v2057 = vshrl.u32 %v2056, 7
        %v2058 = vsub.s32 %v1884, %v2057
        %v2059 = vrot.slane %v1755, %v2058
        %v2060 = vsel %vm1889, %v2059, %v2055
        %v2061 = vlaneseq
        %v2062 = vshrl.u32 %v2061, 7
        %v2063 = vsub.s32 %v1891, %v2062
        %v2064 = vrot.slane %v1758, %v2063
        %v2065 = vsel %vm1896, %v2064, %v2060
        %v2066 = vlaneseq
        %v2067 = vshrl.u32 %v2066, 7
        %v2068 = vsub.s32 %v1898, %v2067
        %v2069 = vrot.slane %v1761, %v2068
        %v2070 = vsel %vm1903, %v2069, %v2065
        %v2071 = vlaneseq
        %v2072 = vshrl.u32 %v2071, 7
        %v2073 = vsub.s32 %v1905, %v2072
        %v2074 = vrot.slane %v1764, %v2073
        %v2075 = vsel %vm1910, %v2074, %v2070
        %v2076 = vlaneseq
        %v2077 = vshrl.u32 %v2076, 7
        %v2078 = vsub.s32 %v1912, %v2077
        %v2079 = vrot.slane %v1767, %v2078
        %v2080 = vsel %vm1917, %v2079, %v2075
        %v2081 = vlaneseq
        %v2082 = vshrl.u32 %v2081, 7
        %v2083 = vsub.s32 %v1919, %v2082
        %v2084 = vrot.slane %v1770, %v2083
        %v2085 = vsel %vm1924, %v2084, %v2080
        %v2086 = vlaneseq
        %v2087 = vshrl.u32 %v2086, 7
        %v2088 = vsub.s32 %v1926, %v2087
        %v2089 = vrot.slane %v1773, %v2088
        %v2090 = vsel %vm1931, %v2089, %v2085
        %vm2091 = vcmask 1041409
        %v2092 = vsel %vm2091, %v2011, %v1932
        %vm2093 = vcmask 1042434
        %v2094 = vsel %vm2093, %v2090, %v2092
        %2096 = vst [vmem:[%s622] sm:$0x7] %v2094
        %s2097 = sand.u32 %s147, 1
        %s2098 = scalar_lea.sflag [#allocation4], %s2097
        %s2099 = sand.u32 %s147, 1
        %s2100 = smul.addr %s2099, 4
        %s2101 = scalar_lea.vmem [#allocation3], %s2100
        // Predicated region
        $region103: #{tpu_custom_call.1} parent=97 // pred_check
          %p2102 = pneg %p157
        $region104: #{tpu_custom_call.1} parent=97 // pred_check_branch
          %2104 = sbr.rel (%p2102) target = $region106
        $region105: #{tpu_custom_call.1} parent=97 // pred_region
          %s2106 = ssub.s32 64, 64
          %2107 = vsyncadd %s2098, %s2106
          %s2108 = smul.addr %s19, 64
          %s2109 = scalar_lea.hbm %s5, %s2108
          %s2111 = sshll.u32 %s2101, 4
          %s2112 = int_to_ptr.vmem [resolvable:$true] %s2111
          %2114 = dma.vmem_to_hbm [thread:$0]  %s2112, 64, %s2109, %s2098
        $region106: #{tpu_custom_call.1} parent=97 // pred_fallthru
          _
      $region98: #{tpu_custom_call.1} parent=5 // pred_fallthru
        _
      %p2115 = scmp.le.s32.totalorder 2, %s14
      // Predicated region
      $region107: #{tpu_custom_call.1} parent=5 // pred_check
        %p2116 = pneg %p2115
      $region108: #{tpu_custom_call.1} parent=5 // pred_check_branch
        %2118 = sbr.rel (%p2116) target = $region110
      $region109: #{tpu_custom_call.1} parent=5 // pred_region
        %s2119 = ssub.s32 %s14, 2
        // Predicated region
        $region111: #{tpu_custom_call.1} parent=109 // pred_check
          %p2120 = pneg %p163
        $region112: #{tpu_custom_call.1} parent=109 // pred_check_branch
          %2122 = sbr.rel (%p2120) target = $region114
        $region113: #{tpu_custom_call.1} parent=109 // pred_region
          %s2123 = sand.u32 %s148, 1
          %s2124 = scalar_lea.sflag [#allocation4], %s2123
          %s2125 = sand.u32 %s148, 1
          %s2126 = smul.addr %s2125, 4
          %s2127 = scalar_lea.vmem [#allocation3], %s2126
          %2128 = dma.done %s2124, 64
        $region114: #{tpu_custom_call.1} parent=109 // pred_fallthru
          _
      $region110: #{tpu_custom_call.1} parent=5 // pred_fallthru
        _
    $region6: #{tpu_custom_call.1} parent=1 // loop_footer
      %s18 = sadd.s32 1, %s14
    $region7: #{tpu_custom_call.1} parent=1 // loop_footer_branch
      %13 = sbr.rel target = $region3
    $region8: #{tpu_custom_call.1} parent=1 // loop_exit
      _
    %2129 = vsyncpa [#allocation4], 1
    %s2130 = scalar_lea.sflag [#allocation4], 1
    %2131 = vsyncpa %s2130, 1

</llo_original>
